<compile_context>
chip_gen: v6e
topology: v6e:2x2x1
jax: 0.10.0
libtpu: 0.0.40
codegen_flags: <defaults>
</compile_context>

<pallas_src>
import jax
import jax.numpy as jnp
from jax.experimental import pallas as pl
from jax.experimental.pallas import tpu as pltpu


def _mlp_kernel(x_ref,
                w1_ref, b1_ref,
                w2_ref, b2_ref,
                w3_ref, b3_ref,
                w4_ref, b4_ref,
                o_ref):
    # Single deliberate cast point: f32 input tile -> bf16 for the MXU.
    x = x_ref[...].astype(jnp.bfloat16)

    # Layer 1: (tile_b, F) @ (F, H) -> f32 accumulator; bias + ReLU in f32.
    h = jnp.dot(x, w1_ref[...], preferred_element_type=jnp.float32) + b1_ref[...]
    h = jnp.maximum(h, 0.0)

    # Layer 2.
    h = jnp.dot(h.astype(jnp.bfloat16), w2_ref[...],
                preferred_element_type=jnp.float32) + b2_ref[...]
    h = jnp.maximum(h, 0.0)

    # Layer 3.
    h = jnp.dot(h.astype(jnp.bfloat16), w3_ref[...],
                preferred_element_type=jnp.float32) + b3_ref[...]
    h = jnp.maximum(h, 0.0)

    # Layer 4 (out_features = 1) on the MXU: contract the H axes of w4 (1, H)
    # and h (tile_b, H) -> lane-dense (1, tile_b) logit row, no transpose and
    # no XLU cross-lane reduction.
    logit = jax.lax.dot_general(
        w4_ref[...], h.astype(jnp.bfloat16),
        dimension_numbers=(((1,), (1,)), ((), ())),
        preferred_element_type=jnp.float32)
    logit = logit + b4_ref[0, 0]           # scalar bias from SMEM

    # Exact sigmoid: exp on the EUP, exact reciprocal on a 2-vreg row is cheap.
    o_ref[...] = 1.0 / (1.0 + jnp.exp(-logit))


def domain_classifier_forward(x, params, *, tile_b=1024):
    """x: (B, input_size) float32; params: dict from init_params."""
    B, F = x.shape
    H = params["w1"].shape[1]

    # ---- Batch-tile selection ----------------------------------------------
    # Keep tile_b a multiple of 256, never larger than the 256-padded batch.
    tile_b = max(256, min((tile_b // 256) * 256, pl.cdiv(B, 256) * 256))

    w_bytes = (F * H + 2 * H * H + H) * 2 + 3 * H * 4 + 4   # bf16 W, f32 biases

    def vmem_estimate(tb):
        x_tile = tb * F * 4 * 2          # f32 input tile, double-buffered
        out_tile = tb * 4 * 2            # f32 (1, tb) output row, double-buffered
        acts = tb * H * 4 * 4            # f32 activation temporaries (rough)
        return x_tile + out_tile + acts + 2 * w_bytes

    # v7x-safe VMEM budget (64 MiB physical; leave headroom for spills/scratch).
    VMEM_BUDGET = 40 << 20
    while tile_b > 256 and vmem_estimate(tile_b) > VMEM_BUDGET:
        tile_b -= 256

    # v7x has 2 TensorCores: keep >= 2 grid steps when the batch allows so the
    # "parallel" axis can shard across both (one extra cheap step on v5e/v6e).
    if pl.cdiv(B, tile_b) == 1 and tile_b >= 512:
        tile_b //= 2

    num_tiles = pl.cdiv(B, tile_b)
    b_pad = num_tiles * tile_b
    if b_pad != B:
        # Padded rows run through the net (finite values) and are sliced off.
        x = jnp.pad(x, ((0, b_pad - B), (0, 0)))

    w1, b1, w2, b2, w3, b3, w4, b4 = (
        params["w1"], params["b1"], params["w2"], params["b2"],
        params["w3"], params["b3"], params["w4"], params["b4"],
    )

    # Weights/biases: full-array blocks with a constant index_map -> DMA'd
    # once, resident in VMEM for every grid step.
    # TODO(synk): for very large input_size on v7x, add pipeline_mode=
    # pl.Buffered(1) here to skip double-buffering the resident weights.
    def resident(a):
        return pl.BlockSpec(a.shape, lambda i: (0,) * a.ndim)

    # Raise the scoped-VMEM limit to match the tile (v5e default is 16 MiB),
    # but stay under v7x's 64 MiB physical VMEM.
    vmem_limit = int(min(max(2 * vmem_estimate(tile_b), 32 << 20), 48 << 20))

    cost = pl.CostEstimate(
        flops=2 * b_pad * (F * H + 2 * H * H + H),
        transcendentals=b_pad,                       # one exp per sample
        bytes_accessed=4 * b_pad * F + w_bytes + 4 * b_pad,
    )

    # TODO(synk): if input_size is large (>~1024), feed x already in bf16 from
    # the upstream producer to halve the layer-1 HBM->VMEM DMA.
    out = pl.pallas_call(
        _mlp_kernel,
        out_shape=jax.ShapeDtypeStruct((num_tiles, tile_b), jnp.float32),
        grid_spec=pltpu.PrefetchScalarGridSpec(
            num_scalar_prefetch=0,
            grid=(num_tiles,),
            in_specs=[
                pl.BlockSpec((tile_b, F), lambda i: (i, 0)),   # x tile walks batch
                resident(w1), resident(b1),
                resident(w2), resident(b2),
                resident(w3), resident(b3),
                resident(w4),
                pl.BlockSpec(memory_space=pltpu.MemorySpace.SMEM),  # b4 scalar
            ],
            # Lane-dense (1, tile_b) output row per grid step.
            out_specs=pl.BlockSpec((1, tile_b), lambda i: (i, 0)),
        ),
        compiler_params=pltpu.CompilerParams(
            dimension_semantics=("parallel",),        # megacore sharding on v7x
            vmem_limit_bytes=vmem_limit,
        ),
        cost_estimate=cost,
    )(x, w1, b1, w2, b2, w3, b3, w4, b4)

    # Row-major (num_tiles, tile_b) flattens back to batch order.
    return out.reshape(b_pad, 1)[:B]


def init_params(key, input_size, hidden_size=256):
    """PyTorch-Linear-style init (uniform +-1/sqrt(fan_in)).

    Weights are stored bf16 as (fan_in, fan_out) — note PyTorch nn.Linear
    state_dicts are (out_features, in_features), so real checkpoints must be
    transposed on import.  The last layer's weight is stored as a (1, H) row.
    Biases stay f32; all matmuls accumulate in f32 inside the kernel.
    """
    def linear(k, fan_in, fan_out):
        kw, kb = jax.random.split(k)
        bound = 1.0 / jnp.sqrt(fan_in)
        w = jax.random.uniform(kw, (fan_in, fan_out), jnp.float32, -bound, bound)
        b = jax.random.uniform(kb, (1, fan_out), jnp.float32, -bound, bound)
        return w.astype(jnp.bfloat16), b

    k1, k2, k3, k4 = jax.random.split(key, 4)
    w1, b1 = linear(k1, input_size, hidden_size)
    w2, b2 = linear(k2, hidden_size, hidden_size)
    w3, b3 = linear(k3, hidden_size, hidden_size)
    w4, b4 = linear(k4, hidden_size, 1)
    return dict(w1=w1, b1=b1, w2=w2, b2=b2, w3=w3, b3=b3,
                w4=w4.reshape(1, hidden_size), b4=b4)


def reference_forward(x, p):
    """Pure-JAX reference using the same (bf16-stored) parameters in f32 math."""
    f32 = lambda a: a.astype(jnp.float32)
    h = jnp.maximum(x @ f32(p["w1"]) + p["b1"], 0.0)
    h = jnp.maximum(h @ f32(p["w2"]) + p["b2"], 0.0)
    h = jnp.maximum(h @ f32(p["w3"]) + p["b3"], 0.0)
    logit = h @ f32(p["w4"]).T + p["b4"]
    return jax.nn.sigmoid(logit)


if __name__ == "__main__":
    key = jax.random.PRNGKey(0)
    k_in, k_par = jax.random.split(key)

    batch = 8
    input_size = 32
    hidden_size = 256

    x = jax.random.normal(k_in, (batch, input_size), jnp.float32)
    params = init_params(k_par, input_size, hidden_size)

    y = domain_classifier_forward(x, params)
    y = jax.block_until_ready(y)

    y_ref = reference_forward(x, params)
    assert y.shape == (batch, 1), y.shape
    # bf16 activations on the MXU vs f32 reference -> modest tolerance; the
    # sigmoid itself is exact (no approx reciprocal).
    assert jnp.allclose(y, y_ref, atol=2e-2, rtol=2e-2), "mismatch vs reference"

    print("KERNEL_OK")
</pallas_src>

<mosaic_0001>
module attributes {stable_mosaic.version = 11 : i64} {
  func.func @_mlp_kernel(%arg0: i32, %arg1: memref<256x32xf32, #tpu.memory_space<vmem>>, %arg2: memref<32x256xbf16, #tpu.memory_space<vmem>>, %arg3: memref<1x256xf32, #tpu.memory_space<vmem>>, %arg4: memref<256x256xbf16, #tpu.memory_space<vmem>>, %arg5: memref<1x256xf32, #tpu.memory_space<vmem>>, %arg6: memref<256x256xbf16, #tpu.memory_space<vmem>>, %arg7: memref<1x256xf32, #tpu.memory_space<vmem>>, %arg8: memref<1x256xbf16, #tpu.memory_space<vmem>>, %arg9: memref<1x1xf32, #tpu.memory_space<smem>>, %arg10: memref<1x256xf32, #tpu.memory_space<vmem>>) attributes {dimension_semantics = [#tpu.dimension_semantics<parallel>], iteration_bounds = array<i64: 1>, scalar_prefetch = 0 : i64, scratch_operands = 0 : i64, tpu.core_type = #tpu.core_type<tc>, window_params = [{transform_indices = @transform_0, window_bounds = array<i64: 256, 32>}, {pipeline_mode = #tpu.pipeline_mode<synchronous>, transform_indices = @transform_1, window_bounds = array<i64: 32, 256>}, {pipeline_mode = #tpu.pipeline_mode<synchronous>, transform_indices = @transform_2, window_bounds = array<i64: 1, 256>}, {pipeline_mode = #tpu.pipeline_mode<synchronous>, transform_indices = @transform_3, window_bounds = array<i64: 256, 256>}, {pipeline_mode = #tpu.pipeline_mode<synchronous>, transform_indices = @transform_4, window_bounds = array<i64: 1, 256>}, {pipeline_mode = #tpu.pipeline_mode<synchronous>, transform_indices = @transform_5, window_bounds = array<i64: 256, 256>}, {pipeline_mode = #tpu.pipeline_mode<synchronous>, transform_indices = @transform_6, window_bounds = array<i64: 1, 256>}, {pipeline_mode = #tpu.pipeline_mode<synchronous>, transform_indices = @transform_7, window_bounds = array<i64: 1, 256>}, {transform_indices = @transform_8, window_bounds = array<i64: 1, 1>}, {transform_indices = @transform_9, window_bounds = array<i64: 1, 256>}]} {
    %c0 = arith.constant 0 : index
    %c0_0 = arith.constant 0 : index
    %0 = vector.load %arg1[%c0, %c0_0] : memref<256x32xf32, #tpu.memory_space<vmem>>, vector<256x32xf32>
    %1 = arith.truncf %0 : vector<256x32xf32> to vector<256x32xbf16>
    %c0_1 = arith.constant 0 : index
    %c0_2 = arith.constant 0 : index
    %2 = vector.load %arg2[%c0_1, %c0_2] : memref<32x256xbf16, #tpu.memory_space<vmem>>, vector<32x256xbf16>
    %cst = arith.constant dense<0.000000e+00> : vector<256x256xf32>
    %3 = tpu.matmul %1, %2, %cst {dimension_numbers = #tpu.dot_dimension_numbers<[1], [0], [0], [1], [0, 0, 1, 1], [], []>} : vector<256x32xbf16>, vector<32x256xbf16>, vector<256x256xf32> -> vector<256x256xf32>
    %c0_3 = arith.constant 0 : index
    %c0_4 = arith.constant 0 : index
    %4 = vector.load %arg3[%c0_3, %c0_4] : memref<1x256xf32, #tpu.memory_space<vmem>>, vector<1x256xf32>
    %5 = vector.broadcast %4 : vector<1x256xf32> to vector<256x256xf32>
    %6 = arith.addf %3, %5 : vector<256x256xf32>
    %cst_5 = arith.constant 0.000000e+00 : f32
    %7 = vector.broadcast %cst_5 : f32 to vector<256x256xf32>
    %8 = arith.maximumf %6, %7 : vector<256x256xf32>
    %9 = arith.truncf %8 : vector<256x256xf32> to vector<256x256xbf16>
    %c0_6 = arith.constant 0 : index
    %c0_7 = arith.constant 0 : index
    %10 = vector.load %arg4[%c0_6, %c0_7] : memref<256x256xbf16, #tpu.memory_space<vmem>>, vector<256x256xbf16>
    %cst_8 = arith.constant dense<0.000000e+00> : vector<256x256xf32>
    %11 = tpu.matmul %9, %10, %cst_8 {dimension_numbers = #tpu.dot_dimension_numbers<[1], [0], [0], [1], [0, 0, 1, 1], [], []>} : vector<256x256xbf16>, vector<256x256xbf16>, vector<256x256xf32> -> vector<256x256xf32>
    %c0_9 = arith.constant 0 : index
    %c0_10 = arith.constant 0 : index
    %12 = vector.load %arg5[%c0_9, %c0_10] : memref<1x256xf32, #tpu.memory_space<vmem>>, vector<1x256xf32>
    %13 = vector.broadcast %12 : vector<1x256xf32> to vector<256x256xf32>
    %14 = arith.addf %11, %13 : vector<256x256xf32>
    %cst_11 = arith.constant 0.000000e+00 : f32
    %15 = vector.broadcast %cst_11 : f32 to vector<256x256xf32>
    %16 = arith.maximumf %14, %15 : vector<256x256xf32>
    %17 = arith.truncf %16 : vector<256x256xf32> to vector<256x256xbf16>
    %c0_12 = arith.constant 0 : index
    %c0_13 = arith.constant 0 : index
    %18 = vector.load %arg6[%c0_12, %c0_13] : memref<256x256xbf16, #tpu.memory_space<vmem>>, vector<256x256xbf16>
    %cst_14 = arith.constant dense<0.000000e+00> : vector<256x256xf32>
    %19 = tpu.matmul %17, %18, %cst_14 {dimension_numbers = #tpu.dot_dimension_numbers<[1], [0], [0], [1], [0, 0, 1, 1], [], []>} : vector<256x256xbf16>, vector<256x256xbf16>, vector<256x256xf32> -> vector<256x256xf32>
    %c0_15 = arith.constant 0 : index
    %c0_16 = arith.constant 0 : index
    %20 = vector.load %arg7[%c0_15, %c0_16] : memref<1x256xf32, #tpu.memory_space<vmem>>, vector<1x256xf32>
    %21 = vector.broadcast %20 : vector<1x256xf32> to vector<256x256xf32>
    %22 = arith.addf %19, %21 : vector<256x256xf32>
    %cst_17 = arith.constant 0.000000e+00 : f32
    %23 = vector.broadcast %cst_17 : f32 to vector<256x256xf32>
    %24 = arith.maximumf %22, %23 : vector<256x256xf32>
    %c0_18 = arith.constant 0 : index
    %c0_19 = arith.constant 0 : index
    %25 = vector.load %arg8[%c0_18, %c0_19] : memref<1x256xbf16, #tpu.memory_space<vmem>>, vector<1x256xbf16>
    %26 = arith.truncf %24 : vector<256x256xf32> to vector<256x256xbf16>
    %cst_20 = arith.constant dense<0.000000e+00> : vector<1x256xf32>
    %27 = tpu.matmul %25, %26, %cst_20 {dimension_numbers = #tpu.dot_dimension_numbers<[1], [1], [0], [0], [0, 0, 1, 0], [], []>} : vector<1x256xbf16>, vector<256x256xbf16>, vector<1x256xf32> -> vector<1x256xf32>
    %c0_21 = arith.constant 0 : index
    %c0_22 = arith.constant 0 : index
    %28 = memref.load %arg9[%c0_21, %c0_22] : memref<1x1xf32, #tpu.memory_space<smem>>
    %29 = vector.broadcast %28 : f32 to vector<1x256xf32>
    %30 = arith.addf %27, %29 : vector<1x256xf32>
    %cst_23 = arith.constant 0.000000e+00 : f32
    %31 = vector.broadcast %cst_23 : f32 to vector<1x256xf32>
    %32 = arith.subf %31, %30 : vector<1x256xf32>
    %33 = math.exp %32 : vector<1x256xf32>
    %cst_24 = arith.constant 1.000000e+00 : f32
    %34 = vector.broadcast %cst_24 : f32 to vector<1x256xf32>
    %35 = arith.addf %34, %33 : vector<1x256xf32>
    %cst_25 = arith.constant 1.000000e+00 : f32
    %36 = vector.broadcast %cst_25 : f32 to vector<1x256xf32>
    %37 = arith.divf %36, %35 : vector<1x256xf32>
    %c0_26 = arith.constant 0 : index
    %c0_27 = arith.constant 0 : index
    %38 = vector.load %arg10[%c0_26, %c0_27] : memref<1x256xf32, #tpu.memory_space<vmem>>, vector<1x256xf32>
    tpu.vector_store %arg10[%c0_26, %c0_27], %37 {strides = array<i32>} : memref<1x256xf32, #tpu.memory_space<vmem>>, vector<1x256xf32>,
    return
  }
  func.func @transform_0(%arg0: i32) -> (i32, i32) {
    %c0_i32 = arith.constant 0 : i32
    %c0_i32_0 = arith.constant 0 : i32
    return %arg0, %c0_i32 : i32, i32
  }
  func.func @transform_1(%arg0: i32) -> (i32, i32) {
    %c0_i32 = arith.constant 0 : i32
    %c0_i32_0 = arith.constant 0 : i32
    %c0_i32_1 = arith.constant 0 : i32
    return %c0_i32, %c0_i32_0 : i32, i32
  }
  func.func @transform_2(%arg0: i32) -> (i32, i32) {
    %c0_i32 = arith.constant 0 : i32
    %c0_i32_0 = arith.constant 0 : i32
    %c0_i32_1 = arith.constant 0 : i32
    return %c0_i32, %c0_i32_0 : i32, i32
  }
  func.func @transform_3(%arg0: i32) -> (i32, i32) {
    %c0_i32 = arith.constant 0 : i32
    %c0_i32_0 = arith.constant 0 : i32
    %c0_i32_1 = arith.constant 0 : i32
    return %c0_i32, %c0_i32_0 : i32, i32
  }
  func.func @transform_4(%arg0: i32) -> (i32, i32) {
    %c0_i32 = arith.constant 0 : i32
    %c0_i32_0 = arith.constant 0 : i32
    %c0_i32_1 = arith.constant 0 : i32
    return %c0_i32, %c0_i32_0 : i32, i32
  }
  func.func @transform_5(%arg0: i32) -> (i32, i32) {
    %c0_i32 = arith.constant 0 : i32
    %c0_i32_0 = arith.constant 0 : i32
    %c0_i32_1 = arith.constant 0 : i32
    return %c0_i32, %c0_i32_0 : i32, i32
  }
  func.func @transform_6(%arg0: i32) -> (i32, i32) {
    %c0_i32 = arith.constant 0 : i32
    %c0_i32_0 = arith.constant 0 : i32
    %c0_i32_1 = arith.constant 0 : i32
    return %c0_i32, %c0_i32_0 : i32, i32
  }
  func.func @transform_7(%arg0: i32) -> (i32, i32) {
    %c0_i32 = arith.constant 0 : i32
    %c0_i32_0 = arith.constant 0 : i32
    %c0_i32_1 = arith.constant 0 : i32
    return %c0_i32, %c0_i32_0 : i32, i32
  }
  func.func @transform_8(%arg0: i32) -> (i32, i32) {
    %c0_i32 = arith.constant 0 : i32
    %c0_i32_0 = arith.constant 0 : i32
    %c0_i32_1 = arith.constant 0 : i32
    return %c0_i32, %c0_i32_0 : i32, i32
  }
  func.func @transform_9(%arg0: i32) -> (i32, i32) {
    %c0_i32 = arith.constant 0 : i32
    %c0_i32_0 = arith.constant 0 : i32
    return %arg0, %c0_i32 : i32, i32
  }
}

</mosaic_0001>

<llo_original>
// kernel: tpu_custom_call.1
$region0: #{tpu_custom_call.1}
  #allocation0 [shape = 'u32[]', space=smem, size = 0x4, offset = 0x4, fixed_abs, tag = 'smem constant byte address 0x4 - core index']
  #allocation1 [shape = 'u32[144,128]{1,0:T(1,128)}', space=vmem, size = 0x12000, scoped, tag = 'internal scratch']
  #allocation2 [shape = 'f32[1,1]{1,0:T(1,128)S(6)}', space=smem, size = 0x200, scoped, tag = 'scoped memory for tpu_custom_call.1']
  %s0 = inlined_call_operand.vmem [shape: f32[256,32], index: 0, kind: input, shape index: {}]
  %s1 = inlined_call_operand.vmem [shape: bf16[32,256], index: 1, kind: input, shape index: {}]
  %s2 = inlined_call_operand.vmem [shape: f32[1,256], index: 2, kind: input, shape index: {}]
  %s3 = inlined_call_operand.vmem [shape: bf16[256,256], index: 3, kind: input, shape index: {}]
  %s4 = inlined_call_operand.vmem [shape: f32[1,256], index: 4, kind: input, shape index: {}]
  %s5 = inlined_call_operand.hbm [shape: bf16[256,256], index: 5, kind: input, shape index: {}]
  %s6 = inlined_call_operand.vmem [shape: f32[1,256], index: 6, kind: input, shape index: {}]
  %s7 = inlined_call_operand.vmem [shape: bf16[1,256], index: 7, kind: input, shape index: {}]
  %s8 = inlined_call_operand.<no memory space> [shape: f32[1,1], index: 8, kind: input, shape index: {}]
  %s9 = inlined_call_operand.hbm [shape: f32[1,256], index: 9, kind: output, shape index: {}]
  %s10 = sld [smem:[#allocation0]]
  $region50: #{tpu_custom_call.1} parent=0
    _
  %s12 = ssub.s32 1, %s10
  %s13 = scalar_select 0, %s12, %s10
  %14 = sst [smem:[#allocation2]] %s8
  $region1: #{tpu_custom_call.1} parent=0
    #allocation3 [shape = 'u8[131072]{0}', space=vmem, size = 0x20000, scoped, tag = 'input window, operand 5, single buffered']
    #allocation4 [shape = 's32[1]{0}', space=sflag, size = 0x4, scoped, tag = 'scoped memory for tpu_custom_call.1']
    #allocation5 [shape = 's32[1]{0}', space=sflag, size = 0x4, scoped, tag = 'scoped memory for tpu_custom_call.1']
    #allocation6 [shape = 'u8[1024]{0}', space=vmem, size = 0x400, scoped, tag = 'output window, operand 0, single buffered']
    %15 = vsyncpa [#allocation4], 0
    %16 = vsyncpa [#allocation5], 0
    // Predicated region
    $region2: #{tpu_custom_call.1} parent=1 // pred_check
      _
    $region3: #{tpu_custom_call.1} parent=1 // pred_check_branch
      %18 = sbr.rel (0) target = $region5
    $region4: #{tpu_custom_call.1} parent=1 // pred_region
      _
    $region5: #{tpu_custom_call.1} parent=1 // pred_fallthru
      _
    // Predicated region
    $region6: #{tpu_custom_call.1} parent=1 // pred_check
      _
    $region7: #{tpu_custom_call.1} parent=1 // pred_check_branch
      %20 = sbr.rel (0) target = $region9
    $region8: #{tpu_custom_call.1} parent=1 // pred_region
      _
    $region9: #{tpu_custom_call.1} parent=1 // pred_fallthru
      _
    // Predicated region
    $region10: #{tpu_custom_call.1} parent=1 // pred_check
      _
    $region11: #{tpu_custom_call.1} parent=1 // pred_check_branch
      %22 = sbr.rel (0) target = $region13
    $region12: #{tpu_custom_call.1} parent=1 // pred_region
      _
    $region13: #{tpu_custom_call.1} parent=1 // pred_fallthru
      _
    // Predicated region
    $region14: #{tpu_custom_call.1} parent=1 // pred_check
      _
    $region15: #{tpu_custom_call.1} parent=1 // pred_check_branch
      %24 = sbr.rel (0) target = $region17
    $region16: #{tpu_custom_call.1} parent=1 // pred_region
      _
    $region17: #{tpu_custom_call.1} parent=1 // pred_fallthru
      _
    // Predicated region
    $region18: #{tpu_custom_call.1} parent=1 // pred_check
      _
    $region19: #{tpu_custom_call.1} parent=1 // pred_check_branch
      %26 = sbr.rel (0) target = $region21
    $region20: #{tpu_custom_call.1} parent=1 // pred_region
      _
    $region21: #{tpu_custom_call.1} parent=1 // pred_fallthru
      _
    // Predicated region
    $region22: #{tpu_custom_call.1} parent=1 // pred_check
      _
    $region23: #{tpu_custom_call.1} parent=1 // pred_check_branch
      %28 = sbr.rel (0) target = $region25
    $region24: #{tpu_custom_call.1} parent=1 // pred_region
      %s30 = ssub.s32 4096, 4096
      %31 = vsyncadd [#allocation4], %s30
      %s32 = sshll.u32 [#allocation3], 4
      %s33 = int_to_ptr.vmem [resolvable:$true] %s32
      %38 = dma.hbm_to_vmem [thread:$0]  %s5, 4096, %s33, [#allocation4], 128, 128, 8
    $region25: #{tpu_custom_call.1} parent=1 // pred_fallthru
      _
    // Predicated region
    $region26: #{tpu_custom_call.1} parent=1 // pred_check
      _
    $region27: #{tpu_custom_call.1} parent=1 // pred_check_branch
      %40 = sbr.rel (0) target = $region29
    $region28: #{tpu_custom_call.1} parent=1 // pred_region
      _
    $region29: #{tpu_custom_call.1} parent=1 // pred_fallthru
      _
    // Predicated region
    $region30: #{tpu_custom_call.1} parent=1 // pred_check
      _
    $region31: #{tpu_custom_call.1} parent=1 // pred_check_branch
      %42 = sbr.rel (0) target = $region33
    $region32: #{tpu_custom_call.1} parent=1 // pred_region
      _
    $region33: #{tpu_custom_call.1} parent=1 // pred_fallthru
      _
    // Predicated region
    $region34: #{tpu_custom_call.1} parent=1 // pred_check
      _
    $region35: #{tpu_custom_call.1} parent=1 // pred_check_branch
      %44 = sbr.rel (0) target = $region37
    $region36: #{tpu_custom_call.1} parent=1 // pred_region
      _
    $region37: #{tpu_custom_call.1} parent=1 // pred_fallthru
      _
    // Predicated region
    $region38: #{tpu_custom_call.1} parent=1 // pred_check
      _
    $region39: #{tpu_custom_call.1} parent=1 // pred_check_branch
      %46 = sbr.rel (0) target = $region41
    $region40: #{tpu_custom_call.1} parent=1 // pred_region
      %47 = dma.done [#allocation4], 4096
    $region41: #{tpu_custom_call.1} parent=1 // pred_fallthru
      _
    %v49 = vld [vmem:[%s0] sm:$0xff]
    %v50 = vld [vmem:[%s0 + $0x8] sm:$0xff]
    %v51 = vld [vmem:[%s0 + $0x10] sm:$0xff]
    %v52 = vld [vmem:[%s0 + $0x18] sm:$0xff]
    %v53 = vld [vmem:[%s0 + $0x20] sm:$0xff]
    %v54 = vld [vmem:[%s0 + $0x28] sm:$0xff]
    %v55 = vld [vmem:[%s0 + $0x30] sm:$0xff]
    %v56 = vld [vmem:[%s0 + $0x38] sm:$0xff]
    %v57 = vld [vmem:[%s0 + $0x40] sm:$0xff]
    %v58 = vld [vmem:[%s0 + $0x48] sm:$0xff]
    %v59 = vld [vmem:[%s0 + $0x50] sm:$0xff]
    %v60 = vld [vmem:[%s0 + $0x58] sm:$0xff]
    %v61 = vld [vmem:[%s0 + $0x60] sm:$0xff]
    %v62 = vld [vmem:[%s0 + $0x68] sm:$0xff]
    %v63 = vld [vmem:[%s0 + $0x70] sm:$0xff]
    %v64 = vld [vmem:[%s0 + $0x78] sm:$0xff]
    %v65 = vld [vmem:[%s0 + $0x80] sm:$0xff]
    %v66 = vld [vmem:[%s0 + $0x88] sm:$0xff]
    %v67 = vld [vmem:[%s0 + $0x90] sm:$0xff]
    %v68 = vld [vmem:[%s0 + $0x98] sm:$0xff]
    %v69 = vld [vmem:[%s0 + $0xa0] sm:$0xff]
    %v70 = vld [vmem:[%s0 + $0xa8] sm:$0xff]
    %v71 = vld [vmem:[%s0 + $0xb0] sm:$0xff]
    %v72 = vld [vmem:[%s0 + $0xb8] sm:$0xff]
    %v73 = vld [vmem:[%s0 + $0xc0] sm:$0xff]
    %v74 = vld [vmem:[%s0 + $0xc8] sm:$0xff]
    %v75 = vld [vmem:[%s0 + $0xd0] sm:$0xff]
    %v76 = vld [vmem:[%s0 + $0xd8] sm:$0xff]
    %v77 = vld [vmem:[%s0 + $0xe0] sm:$0xff]
    %v78 = vld [vmem:[%s0 + $0xe8] sm:$0xff]
    %v79 = vld [vmem:[%s0 + $0xf0] sm:$0xff]
    %v80 = vld [vmem:[%s0 + $0xf8] sm:$0xff]
    %v81 = vpack.c.bf16 %v50, %v49
    %v82 = vpack.c.bf16 %v52, %v51
    %v83 = vpack.c.bf16 %v54, %v53
    %v84 = vpack.c.bf16 %v56, %v55
    %v85 = vpack.c.bf16 %v58, %v57
    %v86 = vpack.c.bf16 %v60, %v59
    %v87 = vpack.c.bf16 %v62, %v61
    %v88 = vpack.c.bf16 %v64, %v63
    %v89 = vpack.c.bf16 %v66, %v65
    %v90 = vpack.c.bf16 %v68, %v67
    %v91 = vpack.c.bf16 %v70, %v69
    %v92 = vpack.c.bf16 %v72, %v71
    %v93 = vpack.c.bf16 %v74, %v73
    %v94 = vpack.c.bf16 %v76, %v75
    %v95 = vpack.c.bf16 %v78, %v77
    %v96 = vpack.c.bf16 %v80, %v79
    %v97 = vld [vmem:[%s1] sm:$0xff]
    %v98 = vld [vmem:[%s1 + $0x8] sm:$0xff]
    %v99 = vld [vmem:[%s1 + $0x10] sm:$0xff]
    %v100 = vld [vmem:[%s1 + $0x18] sm:$0xff]
    %v101 = vld [vmem:[%s2] sm:$0x3]
    %v103 = vlaneseq
    %v104 = vshrl.u32 %v103, 7
    %v105 = vsub.s32 0, %v104
    %v106 = vrot.slane %v101, %v105
    %v107 = vlaneseq
    %v108 = vshrl.u32 %v107, 7
    %v109 = vsub.s32 1, %v108
    %v110 = vrot.slane %v101, %v109
    %v117 = vunpack.c.l.b16 %v97
    %v118 = vunpack.c.h.b16 %v97
    %v119 = vunpack.c.l.b16 %v98
    %v120 = vunpack.c.h.b16 %v98
    %v121 = vunpack.c.l.b16 %v99
    %v122 = vunpack.c.h.b16 %v99
    %v123 = vunpack.c.l.b16 %v100
    %v124 = vunpack.c.h.b16 %v100
    %v125 = vpack.c.b16 %v119, %v117
    %v126 = vpack.c.b16 %v120, %v118
    %v127 = vpack.c.b16 %v123, %v121
    %v128 = vpack.c.b16 %v124, %v122
    %vm133 = vcmask 261120
    %v135 = vsel %vm133, %v81, 0
    %v138 = vsel %vm133, %v82, 0
    %v141 = vsel %vm133, %v83, 0
    %v144 = vsel %vm133, %v84, 0
    %v147 = vsel %vm133, %v85, 0
    %v150 = vsel %vm133, %v86, 0
    %v153 = vsel %vm133, %v87, 0
    %v156 = vsel %vm133, %v88, 0
    %v159 = vsel %vm133, %v89, 0
    %v162 = vsel %vm133, %v90, 0
    %v165 = vsel %vm133, %v91, 0
    %v168 = vsel %vm133, %v92, 0
    %v171 = vsel %vm133, %v93, 0
    %v174 = vsel %vm133, %v94, 0
    %v177 = vsel %vm133, %v95, 0
    %v180 = vsel %vm133, %v96, 0
    %182 = vmatprep.subr.bf16.mxu0 0
    %183 = vmatpush1.bf16.msra.mxu0 0
    %184 = vmatprep.subr.bf16.mxu0 0
    %185 = vmatpush1.bf16.msra.mxu0 0
    %186 = vmatprep.subr.bf16.mxu0 0
    %187 = vmatpush1.bf16.msra.mxu0 0
    %188 = vmatprep.subr.bf16.mxu0 0
    %189 = vmatpush1.bf16.msra.mxu0 0
    %190 = vmatprep.subr.bf16.mxu0 0
    %191 = vmatpush1.bf16.msra.mxu0 0
    %192 = vmatprep.subr.bf16.mxu0 0
    %193 = vmatpush1.bf16.msra.mxu0 0
    %194 = vmatprep.subr.bf16.mxu0 %v128
    %195 = vmatpush1.bf16.msra.mxu0 %v127
    %196 = vmatprep.subr.bf16.mxu0 %v126
    %197 = vmatpush1.bf16.msra.mxu0 %v125
    %198 = vmatprep.subr.bf16.mxu0 0
    %199 = vmatpush2.bf16.msra.mxu0 0
    %200 = vmatprep.subr.bf16.mxu0 0
    %201 = vmatpush2.bf16.msra.mxu0 0
    %202 = vmatprep.subr.bf16.mxu0 0
    %203 = vmatpush2.bf16.msra.mxu0 0
    %204 = vmatprep.subr.bf16.mxu0 0
    %205 = vmatpush2.bf16.msra.mxu0 0
    %206 = vmatprep.subr.bf16.mxu0 0
    %207 = vmatpush2.bf16.msra.mxu0 0
    %208 = vmatprep.subr.bf16.mxu0 0
    %209 = vmatpush2.bf16.msra.mxu0 0
    %210 = vmatprep.subr.bf16.mxu0 0
    %211 = vmatpush2.bf16.msra.mxu0 0
    %212 = vmatprep.subr.bf16.mxu0 0
    %213 = vmatpush2.bf16.msra.mxu0 0
    %214 = vmatprep.mubr.bf16.mxu0 0
    %215 = vmatmul.mubr.bf16.gmra.mxu0 %v135
    %v216 = vpop.f32.mrf.mxu0
    %v217 = vadd.f32 %v106, %v216
    %v218 = vpop.f32.mrf.mxu0
    %v219 = vadd.f32 %v110, %v218
    %v220 = vpop.f32.mrf.mxu0
    %v221 = vadd.f32 %v106, %v220
    %v222 = vpop.f32.mrf.mxu0
    %v223 = vadd.f32 %v110, %v222
    %224 = vmatprep.mubr.bf16.mxu0 0
    %225 = vmatmul.mubr.bf16.gmra.mxu0 %v138
    %v226 = vpop.f32.mrf.mxu0
    %v227 = vadd.f32 %v106, %v226
    %v228 = vpop.f32.mrf.mxu0
    %v229 = vadd.f32 %v110, %v228
    %v230 = vpop.f32.mrf.mxu0
    %v231 = vadd.f32 %v106, %v230
    %v232 = vpop.f32.mrf.mxu0
    %v233 = vadd.f32 %v110, %v232
    %234 = vmatprep.mubr.bf16.mxu0 0
    %235 = vmatmul.mubr.bf16.gmra.mxu0 %v141
    %v236 = vpop.f32.mrf.mxu0
    %v237 = vadd.f32 %v106, %v236
    %v238 = vpop.f32.mrf.mxu0
    %v239 = vadd.f32 %v110, %v238
    %v240 = vpop.f32.mrf.mxu0
    %v241 = vadd.f32 %v106, %v240
    %v242 = vpop.f32.mrf.mxu0
    %v243 = vadd.f32 %v110, %v242
    %244 = vmatprep.mubr.bf16.mxu0 0
    %245 = vmatmul.mubr.bf16.gmra.mxu0 %v144
    %v246 = vpop.f32.mrf.mxu0
    %v247 = vadd.f32 %v106, %v246
    %v248 = vpop.f32.mrf.mxu0
    %v249 = vadd.f32 %v110, %v248
    %v250 = vpop.f32.mrf.mxu0
    %v251 = vadd.f32 %v106, %v250
    %v252 = vpop.f32.mrf.mxu0
    %v253 = vadd.f32 %v110, %v252
    %254 = vmatprep.mubr.bf16.mxu0 0
    %255 = vmatmul.mubr.bf16.gmra.mxu0 %v147
    %v256 = vpop.f32.mrf.mxu0
    %v257 = vadd.f32 %v106, %v256
    %v258 = vpop.f32.mrf.mxu0
    %v259 = vadd.f32 %v110, %v258
    %v260 = vpop.f32.mrf.mxu0
    %v261 = vadd.f32 %v106, %v260
    %v262 = vpop.f32.mrf.mxu0
    %v263 = vadd.f32 %v110, %v262
    %264 = vmatprep.mubr.bf16.mxu0 0
    %265 = vmatmul.mubr.bf16.gmra.mxu0 %v150
    %v266 = vpop.f32.mrf.mxu0
    %v267 = vadd.f32 %v106, %v266
    %v268 = vpop.f32.mrf.mxu0
    %v269 = vadd.f32 %v110, %v268
    %v270 = vpop.f32.mrf.mxu0
    %v271 = vadd.f32 %v106, %v270
    %v272 = vpop.f32.mrf.mxu0
    %v273 = vadd.f32 %v110, %v272
    %274 = vmatprep.mubr.bf16.mxu0 0
    %275 = vmatmul.mubr.bf16.gmra.mxu0 %v153
    %v276 = vpop.f32.mrf.mxu0
    %v277 = vadd.f32 %v106, %v276
    %v278 = vpop.f32.mrf.mxu0
    %v279 = vadd.f32 %v110, %v278
    %v280 = vpop.f32.mrf.mxu0
    %v281 = vadd.f32 %v106, %v280
    %v282 = vpop.f32.mrf.mxu0
    %v283 = vadd.f32 %v110, %v282
    %284 = vmatprep.mubr.bf16.mxu0 0
    %285 = vmatmul.mubr.bf16.gmra.mxu0 %v156
    %v286 = vpop.f32.mrf.mxu0
    %v287 = vadd.f32 %v106, %v286
    %v288 = vpop.f32.mrf.mxu0
    %v289 = vadd.f32 %v110, %v288
    %v290 = vpop.f32.mrf.mxu0
    %v291 = vadd.f32 %v106, %v290
    %v292 = vpop.f32.mrf.mxu0
    %v293 = vadd.f32 %v110, %v292
    %294 = vmatprep.mubr.bf16.mxu0 0
    %295 = vmatmul.mubr.bf16.gmra.mxu0 %v159
    %v296 = vpop.f32.mrf.mxu0
    %v297 = vadd.f32 %v106, %v296
    %v298 = vpop.f32.mrf.mxu0
    %v299 = vadd.f32 %v110, %v298
    %v300 = vpop.f32.mrf.mxu0
    %v301 = vadd.f32 %v106, %v300
    %v302 = vpop.f32.mrf.mxu0
    %v303 = vadd.f32 %v110, %v302
    %304 = vmatprep.mubr.bf16.mxu0 0
    %305 = vmatmul.mubr.bf16.gmra.mxu0 %v162
    %v306 = vpop.f32.mrf.mxu0
    %v307 = vadd.f32 %v106, %v306
    %v308 = vpop.f32.mrf.mxu0
    %v309 = vadd.f32 %v110, %v308
    %v310 = vpop.f32.mrf.mxu0
    %v311 = vadd.f32 %v106, %v310
    %v312 = vpop.f32.mrf.mxu0
    %v313 = vadd.f32 %v110, %v312
    %314 = vmatprep.mubr.bf16.mxu0 0
    %315 = vmatmul.mubr.bf16.gmra.mxu0 %v165
    %v316 = vpop.f32.mrf.mxu0
    %v317 = vadd.f32 %v106, %v316
    %v318 = vpop.f32.mrf.mxu0
    %v319 = vadd.f32 %v110, %v318
    %v320 = vpop.f32.mrf.mxu0
    %v321 = vadd.f32 %v106, %v320
    %v322 = vpop.f32.mrf.mxu0
    %v323 = vadd.f32 %v110, %v322
    %324 = vmatprep.mubr.bf16.mxu0 0
    %325 = vmatmul.mubr.bf16.gmra.mxu0 %v168
    %v326 = vpop.f32.mrf.mxu0
    %v327 = vadd.f32 %v106, %v326
    %v328 = vpop.f32.mrf.mxu0
    %v329 = vadd.f32 %v110, %v328
    %v330 = vpop.f32.mrf.mxu0
    %v331 = vadd.f32 %v106, %v330
    %v332 = vpop.f32.mrf.mxu0
    %v333 = vadd.f32 %v110, %v332
    %334 = vmatprep.mubr.bf16.mxu0 0
    %335 = vmatmul.mubr.bf16.gmra.mxu0 %v171
    %v336 = vpop.f32.mrf.mxu0
    %v337 = vadd.f32 %v106, %v336
    %v338 = vpop.f32.mrf.mxu0
    %v339 = vadd.f32 %v110, %v338
    %v340 = vpop.f32.mrf.mxu0
    %v341 = vadd.f32 %v106, %v340
    %v342 = vpop.f32.mrf.mxu0
    %v343 = vadd.f32 %v110, %v342
    %344 = vmatprep.mubr.bf16.mxu0 0
    %345 = vmatmul.mubr.bf16.gmra.mxu0 %v174
    %v346 = vpop.f32.mrf.mxu0
    %v347 = vadd.f32 %v106, %v346
    %v348 = vpop.f32.mrf.mxu0
    %v349 = vadd.f32 %v110, %v348
    %v350 = vpop.f32.mrf.mxu0
    %v351 = vadd.f32 %v106, %v350
    %v352 = vpop.f32.mrf.mxu0
    %v353 = vadd.f32 %v110, %v352
    %354 = vmatprep.mubr.bf16.mxu0 0
    %355 = vmatmul.mubr.bf16.gmra.mxu0 %v177
    %v356 = vpop.f32.mrf.mxu0
    %v357 = vadd.f32 %v106, %v356
    %v358 = vpop.f32.mrf.mxu0
    %v359 = vadd.f32 %v110, %v358
    %v360 = vpop.f32.mrf.mxu0
    %v361 = vadd.f32 %v106, %v360
    %v362 = vpop.f32.mrf.mxu0
    %v363 = vadd.f32 %v110, %v362
    %364 = vmatprep.mubr.bf16.mxu0 0
    %365 = vmatmul.mubr.bf16.gmra.mxu0 %v180
    %v366 = vpop.f32.mrf.mxu0
    %v367 = vadd.f32 %v106, %v366
    %v368 = vpop.f32.mrf.mxu0
    %v369 = vadd.f32 %v110, %v368
    %v370 = vpop.f32.mrf.mxu0
    %v371 = vadd.f32 %v106, %v370
    %v372 = vpop.f32.mrf.mxu0
    %v373 = vadd.f32 %v110, %v372
    %374 = vdwg.mxu0
    %v375 = vmax.f32 %v217, 0.0
    %v376 = vmax.f32 %v219, 0.0
    %v377 = vmax.f32 %v221, 0.0
    %v378 = vmax.f32 %v223, 0.0
    %v379 = vmax.f32 %v227, 0.0
    %v380 = vmax.f32 %v229, 0.0
    %v381 = vmax.f32 %v231, 0.0
    %v382 = vmax.f32 %v233, 0.0
    %v383 = vmax.f32 %v237, 0.0
    %v384 = vmax.f32 %v239, 0.0
    %v385 = vmax.f32 %v241, 0.0
    %v386 = vmax.f32 %v243, 0.0
    %v387 = vmax.f32 %v247, 0.0
    %v388 = vmax.f32 %v249, 0.0
    %v389 = vmax.f32 %v251, 0.0
    %v390 = vmax.f32 %v253, 0.0
    %v391 = vmax.f32 %v257, 0.0
    %v392 = vmax.f32 %v259, 0.0
    %v393 = vmax.f32 %v261, 0.0
    %v394 = vmax.f32 %v263, 0.0
    %v395 = vmax.f32 %v267, 0.0
    %v396 = vmax.f32 %v269, 0.0
    %v397 = vmax.f32 %v271, 0.0
    %v398 = vmax.f32 %v273, 0.0
    %v399 = vmax.f32 %v277, 0.0
    %v400 = vmax.f32 %v279, 0.0
    %v401 = vmax.f32 %v281, 0.0
    %v402 = vmax.f32 %v283, 0.0
    %v403 = vmax.f32 %v287, 0.0
    %v404 = vmax.f32 %v289, 0.0
    %v405 = vmax.f32 %v291, 0.0
    %v406 = vmax.f32 %v293, 0.0
    %v407 = vmax.f32 %v297, 0.0
    %v408 = vmax.f32 %v299, 0.0
    %v409 = vmax.f32 %v301, 0.0
    %v410 = vmax.f32 %v303, 0.0
    %v411 = vmax.f32 %v307, 0.0
    %v412 = vmax.f32 %v309, 0.0
    %v413 = vmax.f32 %v311, 0.0
    %v414 = vmax.f32 %v313, 0.0
    %v415 = vmax.f32 %v317, 0.0
    %v416 = vmax.f32 %v319, 0.0
    %v417 = vmax.f32 %v321, 0.0
    %v418 = vmax.f32 %v323, 0.0
    %v419 = vmax.f32 %v327, 0.0
    %v420 = vmax.f32 %v329, 0.0
    %v421 = vmax.f32 %v331, 0.0
    %v422 = vmax.f32 %v333, 0.0
    %v423 = vmax.f32 %v337, 0.0
    %v424 = vmax.f32 %v339, 0.0
    %v425 = vmax.f32 %v341, 0.0
    %v426 = vmax.f32 %v343, 0.0
    %v427 = vmax.f32 %v347, 0.0
    %v428 = vmax.f32 %v349, 0.0
    %v429 = vmax.f32 %v351, 0.0
    %v430 = vmax.f32 %v353, 0.0
    %v431 = vmax.f32 %v357, 0.0
    %v432 = vmax.f32 %v359, 0.0
    %v433 = vmax.f32 %v361, 0.0
    %v434 = vmax.f32 %v363, 0.0
    %v435 = vmax.f32 %v367, 0.0
    %v436 = vmax.f32 %v369, 0.0
    %v437 = vmax.f32 %v371, 0.0
    %v438 = vmax.f32 %v373, 0.0
    %v439 = vpack.c.bf16 %v377, %v375
    %v440 = vpack.c.bf16 %v378, %v376
    %v441 = vpack.c.bf16 %v381, %v379
    %v442 = vpack.c.bf16 %v382, %v380
    %v443 = vpack.c.bf16 %v385, %v383
    %v444 = vpack.c.bf16 %v386, %v384
    %v445 = vpack.c.bf16 %v389, %v387
    %v446 = vpack.c.bf16 %v390, %v388
    %v447 = vpack.c.bf16 %v393, %v391
    %v448 = vpack.c.bf16 %v394, %v392
    %v449 = vpack.c.bf16 %v397, %v395
    %v450 = vpack.c.bf16 %v398, %v396
    %v451 = vpack.c.bf16 %v401, %v399
    %v452 = vpack.c.bf16 %v402, %v400
    %v453 = vpack.c.bf16 %v405, %v403
    %v454 = vpack.c.bf16 %v406, %v404
    %v455 = vpack.c.bf16 %v409, %v407
    %v456 = vpack.c.bf16 %v410, %v408
    %v457 = vpack.c.bf16 %v413, %v411
    %v458 = vpack.c.bf16 %v414, %v412
    %v459 = vpack.c.bf16 %v417, %v415
    %v460 = vpack.c.bf16 %v418, %v416
    %v461 = vpack.c.bf16 %v421, %v419
    %v462 = vpack.c.bf16 %v422, %v420
    %v463 = vpack.c.bf16 %v425, %v423
    %v464 = vpack.c.bf16 %v426, %v424
    %v465 = vpack.c.bf16 %v429, %v427
    %v466 = vpack.c.bf16 %v430, %v428
    %v467 = vpack.c.bf16 %v433, %v431
    %v468 = vpack.c.bf16 %v434, %v432
    %v469 = vpack.c.bf16 %v437, %v435
    %v470 = vpack.c.bf16 %v438, %v436
    %v471 = vld [vmem:[%s3] sm:$0xff]
    %v472 = vld [vmem:[%s3 + $0x8] sm:$0xff]
    %v473 = vld [vmem:[%s3 + $0x10] sm:$0xff]
    %v474 = vld [vmem:[%s3 + $0x18] sm:$0xff]
    %v475 = vld [vmem:[%s3 + $0x20] sm:$0xff]
    %v476 = vld [vmem:[%s3 + $0x28] sm:$0xff]
    %v477 = vld [vmem:[%s3 + $0x30] sm:$0xff]
    %v478 = vld [vmem:[%s3 + $0x38] sm:$0xff]
    %v479 = vld [vmem:[%s3 + $0x40] sm:$0xff]
    %v480 = vld [vmem:[%s3 + $0x48] sm:$0xff]
    %v481 = vld [vmem:[%s3 + $0x50] sm:$0xff]
    %v482 = vld [vmem:[%s3 + $0x58] sm:$0xff]
    %v483 = vld [vmem:[%s3 + $0x60] sm:$0xff]
    %v484 = vld [vmem:[%s3 + $0x68] sm:$0xff]
    %v485 = vld [vmem:[%s3 + $0x70] sm:$0xff]
    %v486 = vld [vmem:[%s3 + $0x78] sm:$0xff]
    %v487 = vld [vmem:[%s3 + $0x80] sm:$0xff]
    %v488 = vld [vmem:[%s3 + $0x88] sm:$0xff]
    %v489 = vld [vmem:[%s3 + $0x90] sm:$0xff]
    %v490 = vld [vmem:[%s3 + $0x98] sm:$0xff]
    %v491 = vld [vmem:[%s3 + $0xa0] sm:$0xff]
    %v492 = vld [vmem:[%s3 + $0xa8] sm:$0xff]
    %v493 = vld [vmem:[%s3 + $0xb0] sm:$0xff]
    %v494 = vld [vmem:[%s3 + $0xb8] sm:$0xff]
    %v495 = vld [vmem:[%s3 + $0xc0] sm:$0xff]
    %v496 = vld [vmem:[%s3 + $0xc8] sm:$0xff]
    %v497 = vld [vmem:[%s3 + $0xd0] sm:$0xff]
    %v498 = vld [vmem:[%s3 + $0xd8] sm:$0xff]
    %v499 = vld [vmem:[%s3 + $0xe0] sm:$0xff]
    %v500 = vld [vmem:[%s3 + $0xe8] sm:$0xff]
    %v501 = vld [vmem:[%s3 + $0xf0] sm:$0xff]
    %v502 = vld [vmem:[%s3 + $0xf8] sm:$0xff]
    %v503 = vld [vmem:[%s4] sm:$0x3]
    %v505 = vlaneseq
    %v506 = vshrl.u32 %v505, 7
    %v507 = vsub.s32 0, %v506
    %v508 = vrot.slane %v503, %v507
    %v509 = vlaneseq
    %v510 = vshrl.u32 %v509, 7
    %v511 = vsub.s32 1, %v510
    %v512 = vrot.slane %v503, %v511
    %v547 = vunpack.c.l.b16 %v471
    %v548 = vunpack.c.h.b16 %v471
    %v549 = vunpack.c.l.b16 %v472
    %v550 = vunpack.c.h.b16 %v472
    %v551 = vunpack.c.l.b16 %v473
    %v552 = vunpack.c.h.b16 %v473
    %v553 = vunpack.c.l.b16 %v474
    %v554 = vunpack.c.h.b16 %v474
    %v555 = vunpack.c.l.b16 %v475
    %v556 = vunpack.c.h.b16 %v475
    %v557 = vunpack.c.l.b16 %v476
    %v558 = vunpack.c.h.b16 %v476
    %v559 = vunpack.c.l.b16 %v477
    %v560 = vunpack.c.h.b16 %v477
    %v561 = vunpack.c.l.b16 %v478
    %v562 = vunpack.c.h.b16 %v478
    %v563 = vunpack.c.l.b16 %v479
    %v564 = vunpack.c.h.b16 %v479
    %v565 = vunpack.c.l.b16 %v480
    %v566 = vunpack.c.h.b16 %v480
    %v567 = vunpack.c.l.b16 %v481
    %v568 = vunpack.c.h.b16 %v481
    %v569 = vunpack.c.l.b16 %v482
    %v570 = vunpack.c.h.b16 %v482
    %v571 = vunpack.c.l.b16 %v483
    %v572 = vunpack.c.h.b16 %v483
    %v573 = vunpack.c.l.b16 %v484
    %v574 = vunpack.c.h.b16 %v484
    %v575 = vunpack.c.l.b16 %v485
    %v576 = vunpack.c.h.b16 %v485
    %v577 = vunpack.c.l.b16 %v486
    %v578 = vunpack.c.h.b16 %v486
    %v579 = vunpack.c.l.b16 %v487
    %v580 = vunpack.c.h.b16 %v487
    %v581 = vunpack.c.l.b16 %v488
    %v582 = vunpack.c.h.b16 %v488
    %v583 = vunpack.c.l.b16 %v489
    %v584 = vunpack.c.h.b16 %v489
    %v585 = vunpack.c.l.b16 %v490
    %v586 = vunpack.c.h.b16 %v490
    %v587 = vunpack.c.l.b16 %v491
    %v588 = vunpack.c.h.b16 %v491
    %v589 = vunpack.c.l.b16 %v492
    %v590 = vunpack.c.h.b16 %v492
    %v591 = vunpack.c.l.b16 %v493
    %v592 = vunpack.c.h.b16 %v493
    %v593 = vunpack.c.l.b16 %v494
    %v594 = vunpack.c.h.b16 %v494
    %v595 = vunpack.c.l.b16 %v495
    %v596 = vunpack.c.h.b16 %v495
    %v597 = vunpack.c.l.b16 %v496
    %v598 = vunpack.c.h.b16 %v496
    %v599 = vunpack.c.l.b16 %v497
    %v600 = vunpack.c.h.b16 %v497
    %v601 = vunpack.c.l.b16 %v498
    %v602 = vunpack.c.h.b16 %v498
    %v603 = vunpack.c.l.b16 %v499
    %v604 = vunpack.c.h.b16 %v499
    %v605 = vunpack.c.l.b16 %v500
    %v606 = vunpack.c.h.b16 %v500
    %v607 = vunpack.c.l.b16 %v501
    %v608 = vunpack.c.h.b16 %v501
    %v609 = vunpack.c.l.b16 %v502
    %v610 = vunpack.c.h.b16 %v502
    %v611 = vpack.c.b16 %v549, %v547
    %v612 = vpack.c.b16 %v550, %v548
    %v613 = vpack.c.b16 %v553, %v551
    %v614 = vpack.c.b16 %v554, %v552
    %v615 = vpack.c.b16 %v557, %v555
    %v616 = vpack.c.b16 %v558, %v556
    %v617 = vpack.c.b16 %v561, %v559
    %v618 = vpack.c.b16 %v562, %v560
    %v619 = vpack.c.b16 %v565, %v563
    %v620 = vpack.c.b16 %v566, %v564
    %v621 = vpack.c.b16 %v569, %v567
    %v622 = vpack.c.b16 %v570, %v568
    %v623 = vpack.c.b16 %v573, %v571
    %v624 = vpack.c.b16 %v574, %v572
    %v625 = vpack.c.b16 %v577, %v575
    %v626 = vpack.c.b16 %v578, %v576
    %v627 = vpack.c.b16 %v581, %v579
    %v628 = vpack.c.b16 %v582, %v580
    %v629 = vpack.c.b16 %v585, %v583
    %v630 = vpack.c.b16 %v586, %v584
    %v631 = vpack.c.b16 %v589, %v587
    %v632 = vpack.c.b16 %v590, %v588
    %v633 = vpack.c.b16 %v593, %v591
    %v634 = vpack.c.b16 %v594, %v592
    %v635 = vpack.c.b16 %v597, %v595
    %v636 = vpack.c.b16 %v598, %v596
    %v637 = vpack.c.b16 %v601, %v599
    %v638 = vpack.c.b16 %v602, %v600
    %v639 = vpack.c.b16 %v605, %v603
    %v640 = vpack.c.b16 %v606, %v604
    %v641 = vpack.c.b16 %v609, %v607
    %v642 = vpack.c.b16 %v610, %v608
    %675 = vmatprep.subr.bf16.mxu0 %v626
    %676 = vmatpush1.bf16.msra.mxu0 %v625
    %677 = vmatprep.subr.bf16.mxu0 %v624
    %678 = vmatpush1.bf16.msra.mxu0 %v623
    %679 = vmatprep.subr.bf16.mxu0 %v622
    %680 = vmatpush1.bf16.msra.mxu0 %v621
    %681 = vmatprep.subr.bf16.mxu0 %v620
    %682 = vmatpush1.bf16.msra.mxu0 %v619
    %683 = vmatprep.subr.bf16.mxu0 %v618
    %684 = vmatpush1.bf16.msra.mxu0 %v617
    %685 = vmatprep.subr.bf16.mxu0 %v616
    %686 = vmatpush1.bf16.msra.mxu0 %v615
    %687 = vmatprep.subr.bf16.mxu0 %v614
    %688 = vmatpush1.bf16.msra.mxu0 %v613
    %689 = vmatprep.subr.bf16.mxu0 %v612
    %690 = vmatpush1.bf16.msra.mxu0 %v611
    %691 = vmatprep.subr.bf16.mxu0 %v642
    %692 = vmatpush2.bf16.msra.mxu0 %v641
    %693 = vmatprep.subr.bf16.mxu0 %v640
    %694 = vmatpush2.bf16.msra.mxu0 %v639
    %695 = vmatprep.subr.bf16.mxu0 %v638
    %696 = vmatpush2.bf16.msra.mxu0 %v637
    %697 = vmatprep.subr.bf16.mxu0 %v636
    %698 = vmatpush2.bf16.msra.mxu0 %v635
    %699 = vmatprep.subr.bf16.mxu0 %v634
    %700 = vmatpush2.bf16.msra.mxu0 %v633
    %701 = vmatprep.subr.bf16.mxu0 %v632
    %702 = vmatpush2.bf16.msra.mxu0 %v631
    %703 = vmatprep.subr.bf16.mxu0 %v630
    %704 = vmatpush2.bf16.msra.mxu0 %v629
    %705 = vmatprep.subr.bf16.mxu0 %v628
    %706 = vmatpush2.bf16.msra.mxu0 %v627
    %707 = vmatprep.mubr.bf16.mxu0 %v440
    %708 = vmatmul.mubr.bf16.gmra.mxu0 %v439
    %v709 = vpop.f32.mrf.mxu0
    %v710 = vadd.f32 %v508, %v709
    %v711 = vpop.f32.mrf.mxu0
    %v712 = vadd.f32 %v512, %v711
    %v713 = vpop.f32.mrf.mxu0
    %v714 = vadd.f32 %v508, %v713
    %v715 = vpop.f32.mrf.mxu0
    %v716 = vadd.f32 %v512, %v715
    %717 = vmatprep.mubr.bf16.mxu0 %v442
    %718 = vmatmul.mubr.bf16.gmra.mxu0 %v441
    %v719 = vpop.f32.mrf.mxu0
    %v720 = vadd.f32 %v508, %v719
    %v721 = vpop.f32.mrf.mxu0
    %v722 = vadd.f32 %v512, %v721
    %v723 = vpop.f32.mrf.mxu0
    %v724 = vadd.f32 %v508, %v723
    %v725 = vpop.f32.mrf.mxu0
    %v726 = vadd.f32 %v512, %v725
    %727 = vmatprep.mubr.bf16.mxu0 %v444
    %728 = vmatmul.mubr.bf16.gmra.mxu0 %v443
    %v729 = vpop.f32.mrf.mxu0
    %v730 = vadd.f32 %v508, %v729
    %v731 = vpop.f32.mrf.mxu0
    %v732 = vadd.f32 %v512, %v731
    %v733 = vpop.f32.mrf.mxu0
    %v734 = vadd.f32 %v508, %v733
    %v735 = vpop.f32.mrf.mxu0
    %v736 = vadd.f32 %v512, %v735
    %737 = vmatprep.mubr.bf16.mxu0 %v446
    %738 = vmatmul.mubr.bf16.gmra.mxu0 %v445
    %v739 = vpop.f32.mrf.mxu0
    %v740 = vadd.f32 %v508, %v739
    %v741 = vpop.f32.mrf.mxu0
    %v742 = vadd.f32 %v512, %v741
    %v743 = vpop.f32.mrf.mxu0
    %v744 = vadd.f32 %v508, %v743
    %v745 = vpop.f32.mrf.mxu0
    %v746 = vadd.f32 %v512, %v745
    %747 = vmatprep.mubr.bf16.mxu0 %v448
    %748 = vmatmul.mubr.bf16.gmra.mxu0 %v447
    %v749 = vpop.f32.mrf.mxu0
    %v750 = vadd.f32 %v508, %v749
    %v751 = vpop.f32.mrf.mxu0
    %v752 = vadd.f32 %v512, %v751
    %v753 = vpop.f32.mrf.mxu0
    %v754 = vadd.f32 %v508, %v753
    %v755 = vpop.f32.mrf.mxu0
    %v756 = vadd.f32 %v512, %v755
    %757 = vmatprep.mubr.bf16.mxu0 %v450
    %758 = vmatmul.mubr.bf16.gmra.mxu0 %v449
    %v759 = vpop.f32.mrf.mxu0
    %v760 = vadd.f32 %v508, %v759
    %v761 = vpop.f32.mrf.mxu0
    %v762 = vadd.f32 %v512, %v761
    %v763 = vpop.f32.mrf.mxu0
    %v764 = vadd.f32 %v508, %v763
    %v765 = vpop.f32.mrf.mxu0
    %v766 = vadd.f32 %v512, %v765
    %767 = vmatprep.mubr.bf16.mxu0 %v452
    %768 = vmatmul.mubr.bf16.gmra.mxu0 %v451
    %v769 = vpop.f32.mrf.mxu0
    %v770 = vadd.f32 %v508, %v769
    %v771 = vpop.f32.mrf.mxu0
    %v772 = vadd.f32 %v512, %v771
    %v773 = vpop.f32.mrf.mxu0
    %v774 = vadd.f32 %v508, %v773
    %v775 = vpop.f32.mrf.mxu0
    %v776 = vadd.f32 %v512, %v775
    %777 = vmatprep.mubr.bf16.mxu0 %v454
    %778 = vmatmul.mubr.bf16.gmra.mxu0 %v453
    %v779 = vpop.f32.mrf.mxu0
    %v780 = vadd.f32 %v508, %v779
    %v781 = vpop.f32.mrf.mxu0
    %v782 = vadd.f32 %v512, %v781
    %v783 = vpop.f32.mrf.mxu0
    %v784 = vadd.f32 %v508, %v783
    %v785 = vpop.f32.mrf.mxu0
    %v786 = vadd.f32 %v512, %v785
    %787 = vmatprep.mubr.bf16.mxu0 %v456
    %788 = vmatmul.mubr.bf16.gmra.mxu0 %v455
    %v789 = vpop.f32.mrf.mxu0
    %v790 = vadd.f32 %v508, %v789
    %v791 = vpop.f32.mrf.mxu0
    %v792 = vadd.f32 %v512, %v791
    %v793 = vpop.f32.mrf.mxu0
    %v794 = vadd.f32 %v508, %v793
    %v795 = vpop.f32.mrf.mxu0
    %v796 = vadd.f32 %v512, %v795
    %797 = vmatprep.mubr.bf16.mxu0 %v458
    %798 = vmatmul.mubr.bf16.gmra.mxu0 %v457
    %v799 = vpop.f32.mrf.mxu0
    %v800 = vadd.f32 %v508, %v799
    %v801 = vpop.f32.mrf.mxu0
    %v802 = vadd.f32 %v512, %v801
    %v803 = vpop.f32.mrf.mxu0
    %v804 = vadd.f32 %v508, %v803
    %v805 = vpop.f32.mrf.mxu0
    %v806 = vadd.f32 %v512, %v805
    %807 = vmatprep.mubr.bf16.mxu0 %v460
    %808 = vmatmul.mubr.bf16.gmra.mxu0 %v459
    %v809 = vpop.f32.mrf.mxu0
    %v810 = vadd.f32 %v508, %v809
    %v811 = vpop.f32.mrf.mxu0
    %v812 = vadd.f32 %v512, %v811
    %v813 = vpop.f32.mrf.mxu0
    %v814 = vadd.f32 %v508, %v813
    %v815 = vpop.f32.mrf.mxu0
    %v816 = vadd.f32 %v512, %v815
    %817 = vmatprep.mubr.bf16.mxu0 %v462
    %818 = vmatmul.mubr.bf16.gmra.mxu0 %v461
    %v819 = vpop.f32.mrf.mxu0
    %v820 = vadd.f32 %v508, %v819
    %v821 = vpop.f32.mrf.mxu0
    %v822 = vadd.f32 %v512, %v821
    %v823 = vpop.f32.mrf.mxu0
    %v824 = vadd.f32 %v508, %v823
    %v825 = vpop.f32.mrf.mxu0
    %v826 = vadd.f32 %v512, %v825
    %827 = vmatprep.mubr.bf16.mxu0 %v464
    %828 = vmatmul.mubr.bf16.gmra.mxu0 %v463
    %v829 = vpop.f32.mrf.mxu0
    %v830 = vadd.f32 %v508, %v829
    %v831 = vpop.f32.mrf.mxu0
    %v832 = vadd.f32 %v512, %v831
    %v833 = vpop.f32.mrf.mxu0
    %v834 = vadd.f32 %v508, %v833
    %v835 = vpop.f32.mrf.mxu0
    %v836 = vadd.f32 %v512, %v835
    %837 = vmatprep.mubr.bf16.mxu0 %v466
    %838 = vmatmul.mubr.bf16.gmra.mxu0 %v465
    %v839 = vpop.f32.mrf.mxu0
    %v840 = vadd.f32 %v508, %v839
    %v841 = vpop.f32.mrf.mxu0
    %v842 = vadd.f32 %v512, %v841
    %v843 = vpop.f32.mrf.mxu0
    %v844 = vadd.f32 %v508, %v843
    %v845 = vpop.f32.mrf.mxu0
    %v846 = vadd.f32 %v512, %v845
    %847 = vmatprep.mubr.bf16.mxu0 %v468
    %848 = vmatmul.mubr.bf16.gmra.mxu0 %v467
    %v849 = vpop.f32.mrf.mxu0
    %v850 = vadd.f32 %v508, %v849
    %v851 = vpop.f32.mrf.mxu0
    %v852 = vadd.f32 %v512, %v851
    %v853 = vpop.f32.mrf.mxu0
    %v854 = vadd.f32 %v508, %v853
    %v855 = vpop.f32.mrf.mxu0
    %v856 = vadd.f32 %v512, %v855
    %857 = vmatprep.mubr.bf16.mxu0 %v470
    %858 = vmatmul.mubr.bf16.gmra.mxu0 %v469
    %v859 = vpop.f32.mrf.mxu0
    %v860 = vadd.f32 %v508, %v859
    %v861 = vpop.f32.mrf.mxu0
    %v862 = vadd.f32 %v512, %v861
    %v863 = vpop.f32.mrf.mxu0
    %v864 = vadd.f32 %v508, %v863
    %v865 = vpop.f32.mrf.mxu0
    %v866 = vadd.f32 %v512, %v865
    %867 = vdwg.mxu0
    %v868 = vmax.f32 %v710, 0.0
    %v869 = vmax.f32 %v712, 0.0
    %v870 = vmax.f32 %v714, 0.0
    %v871 = vmax.f32 %v716, 0.0
    %v872 = vmax.f32 %v720, 0.0
    %v873 = vmax.f32 %v722, 0.0
    %v874 = vmax.f32 %v724, 0.0
    %v875 = vmax.f32 %v726, 0.0
    %v876 = vmax.f32 %v730, 0.0
    %v877 = vmax.f32 %v732, 0.0
    %v878 = vmax.f32 %v734, 0.0
    %v879 = vmax.f32 %v736, 0.0
    %v880 = vmax.f32 %v740, 0.0
    %v881 = vmax.f32 %v742, 0.0
    %v882 = vmax.f32 %v744, 0.0
    %v883 = vmax.f32 %v746, 0.0
    %v884 = vmax.f32 %v750, 0.0
    %v885 = vmax.f32 %v752, 0.0
    %v886 = vmax.f32 %v754, 0.0
    %v887 = vmax.f32 %v756, 0.0
    %v888 = vmax.f32 %v760, 0.0
    %v889 = vmax.f32 %v762, 0.0
    %v890 = vmax.f32 %v764, 0.0
    %v891 = vmax.f32 %v766, 0.0
    %v892 = vmax.f32 %v770, 0.0
    %v893 = vmax.f32 %v772, 0.0
    %v894 = vmax.f32 %v774, 0.0
    %v895 = vmax.f32 %v776, 0.0
    %v896 = vmax.f32 %v780, 0.0
    %v897 = vmax.f32 %v782, 0.0
    %v898 = vmax.f32 %v784, 0.0
    %v899 = vmax.f32 %v786, 0.0
    %v900 = vmax.f32 %v790, 0.0
    %v901 = vmax.f32 %v792, 0.0
    %v902 = vmax.f32 %v794, 0.0
    %v903 = vmax.f32 %v796, 0.0
    %v904 = vmax.f32 %v800, 0.0
    %v905 = vmax.f32 %v802, 0.0
    %v906 = vmax.f32 %v804, 0.0
    %v907 = vmax.f32 %v806, 0.0
    %v908 = vmax.f32 %v810, 0.0
    %v909 = vmax.f32 %v812, 0.0
    %v910 = vmax.f32 %v814, 0.0
    %v911 = vmax.f32 %v816, 0.0
    %v912 = vmax.f32 %v820, 0.0
    %v913 = vmax.f32 %v822, 0.0
    %v914 = vmax.f32 %v824, 0.0
    %v915 = vmax.f32 %v826, 0.0
    %v916 = vmax.f32 %v830, 0.0
    %v917 = vmax.f32 %v832, 0.0
    %v918 = vmax.f32 %v834, 0.0
    %v919 = vmax.f32 %v836, 0.0
    %v920 = vmax.f32 %v840, 0.0
    %v921 = vmax.f32 %v842, 0.0
    %v922 = vmax.f32 %v844, 0.0
    %v923 = vmax.f32 %v846, 0.0
    %v924 = vmax.f32 %v850, 0.0
    %v925 = vmax.f32 %v852, 0.0
    %v926 = vmax.f32 %v854, 0.0
    %v927 = vmax.f32 %v856, 0.0
    %v928 = vmax.f32 %v860, 0.0
    %v929 = vmax.f32 %v862, 0.0
    %v930 = vmax.f32 %v864, 0.0
    %v931 = vmax.f32 %v866, 0.0
    %v932 = vpack.c.bf16 %v870, %v868
    %v933 = vpack.c.bf16 %v871, %v869
    %v934 = vpack.c.bf16 %v874, %v872
    %v935 = vpack.c.bf16 %v875, %v873
    %v936 = vpack.c.bf16 %v878, %v876
    %v937 = vpack.c.bf16 %v879, %v877
    %v938 = vpack.c.bf16 %v882, %v880
    %v939 = vpack.c.bf16 %v883, %v881
    %v940 = vpack.c.bf16 %v886, %v884
    %v941 = vpack.c.bf16 %v887, %v885
    %v942 = vpack.c.bf16 %v890, %v888
    %v943 = vpack.c.bf16 %v891, %v889
    %v944 = vpack.c.bf16 %v894, %v892
    %v945 = vpack.c.bf16 %v895, %v893
    %v946 = vpack.c.bf16 %v898, %v896
    %v947 = vpack.c.bf16 %v899, %v897
    %v948 = vpack.c.bf16 %v902, %v900
    %v949 = vpack.c.bf16 %v903, %v901
    %v950 = vpack.c.bf16 %v906, %v904
    %v951 = vpack.c.bf16 %v907, %v905
    %v952 = vpack.c.bf16 %v910, %v908
    %v953 = vpack.c.bf16 %v911, %v909
    %v954 = vpack.c.bf16 %v914, %v912
    %v955 = vpack.c.bf16 %v915, %v913
    %v956 = vpack.c.bf16 %v918, %v916
    %v957 = vpack.c.bf16 %v919, %v917
    %v958 = vpack.c.bf16 %v922, %v920
    %v959 = vpack.c.bf16 %v923, %v921
    %v960 = vpack.c.bf16 %v926, %v924
    %v961 = vpack.c.bf16 %v927, %v925
    %v962 = vpack.c.bf16 %v930, %v928
    %v963 = vpack.c.bf16 %v931, %v929
    %v964 = vld [vmem:[#allocation3] sm:$0xff]
    %v965 = vld [vmem:[#allocation3 + $0x8] sm:$0xff]
    %v966 = vld [vmem:[#allocation3 + $0x10] sm:$0xff]
    %v967 = vld [vmem:[#allocation3 + $0x18] sm:$0xff]
    %v968 = vld [vmem:[#allocation3 + $0x20] sm:$0xff]
    %v969 = vld [vmem:[#allocation3 + $0x28] sm:$0xff]
    %v970 = vld [vmem:[#allocation3 + $0x30] sm:$0xff]
    %v971 = vld [vmem:[#allocation3 + $0x38] sm:$0xff]
    %v972 = vld [vmem:[#allocation3 + $0x40] sm:$0xff]
    %v973 = vld [vmem:[#allocation3 + $0x48] sm:$0xff]
    %v974 = vld [vmem:[#allocation3 + $0x50] sm:$0xff]
    %v975 = vld [vmem:[#allocation3 + $0x58] sm:$0xff]
    %v976 = vld [vmem:[#allocation3 + $0x60] sm:$0xff]
    %v977 = vld [vmem:[#allocation3 + $0x68] sm:$0xff]
    %v978 = vld [vmem:[#allocation3 + $0x70] sm:$0xff]
    %v979 = vld [vmem:[#allocation3 + $0x78] sm:$0xff]
    %v980 = vld [vmem:[#allocation3 + $0x80] sm:$0xff]
    %v981 = vld [vmem:[#allocation3 + $0x88] sm:$0xff]
    %v982 = vld [vmem:[#allocation3 + $0x90] sm:$0xff]
    %v983 = vld [vmem:[#allocation3 + $0x98] sm:$0xff]
    %v984 = vld [vmem:[#allocation3 + $0xa0] sm:$0xff]
    %v985 = vld [vmem:[#allocation3 + $0xa8] sm:$0xff]
    %v986 = vld [vmem:[#allocation3 + $0xb0] sm:$0xff]
    %v987 = vld [vmem:[#allocation3 + $0xb8] sm:$0xff]
    %v988 = vld [vmem:[#allocation3 + $0xc0] sm:$0xff]
    %v989 = vld [vmem:[#allocation3 + $0xc8] sm:$0xff]
    %v990 = vld [vmem:[#allocation3 + $0xd0] sm:$0xff]
    %v991 = vld [vmem:[#allocation3 + $0xd8] sm:$0xff]
    %v992 = vld [vmem:[#allocation3 + $0xe0] sm:$0xff]
    %v993 = vld [vmem:[#allocation3 + $0xe8] sm:$0xff]
    %v994 = vld [vmem:[#allocation3 + $0xf0] sm:$0xff]
    %v995 = vld [vmem:[#allocation3 + $0xf8] sm:$0xff]
    %v996 = vld [vmem:[%s6] sm:$0x3]
    %v998 = vlaneseq
    %v999 = vshrl.u32 %v998, 7
    %v1000 = vsub.s32 0, %v999
    %v1001 = vrot.slane %v996, %v1000
    %v1002 = vlaneseq
    %v1003 = vshrl.u32 %v1002, 7
    %v1004 = vsub.s32 1, %v1003
    %v1005 = vrot.slane %v996, %v1004
    %v1040 = vunpack.c.l.b16 %v964
    %v1041 = vunpack.c.h.b16 %v964
    %v1042 = vunpack.c.l.b16 %v965
    %v1043 = vunpack.c.h.b16 %v965
    %v1044 = vunpack.c.l.b16 %v966
    %v1045 = vunpack.c.h.b16 %v966
    %v1046 = vunpack.c.l.b16 %v967
    %v1047 = vunpack.c.h.b16 %v967
    %v1048 = vunpack.c.l.b16 %v968
    %v1049 = vunpack.c.h.b16 %v968
    %v1050 = vunpack.c.l.b16 %v969
    %v1051 = vunpack.c.h.b16 %v969
    %v1052 = vunpack.c.l.b16 %v970
    %v1053 = vunpack.c.h.b16 %v970
    %v1054 = vunpack.c.l.b16 %v971
    %v1055 = vunpack.c.h.b16 %v971
    %v1056 = vunpack.c.l.b16 %v972
    %v1057 = vunpack.c.h.b16 %v972
    %v1058 = vunpack.c.l.b16 %v973
    %v1059 = vunpack.c.h.b16 %v973
    %v1060 = vunpack.c.l.b16 %v974
    %v1061 = vunpack.c.h.b16 %v974
    %v1062 = vunpack.c.l.b16 %v975
    %v1063 = vunpack.c.h.b16 %v975
    %v1064 = vunpack.c.l.b16 %v976
    %v1065 = vunpack.c.h.b16 %v976
    %v1066 = vunpack.c.l.b16 %v977
    %v1067 = vunpack.c.h.b16 %v977
    %v1068 = vunpack.c.l.b16 %v978
    %v1069 = vunpack.c.h.b16 %v978
    %v1070 = vunpack.c.l.b16 %v979
    %v1071 = vunpack.c.h.b16 %v979
    %v1072 = vunpack.c.l.b16 %v980
    %v1073 = vunpack.c.h.b16 %v980
    %v1074 = vunpack.c.l.b16 %v981
    %v1075 = vunpack.c.h.b16 %v981
    %v1076 = vunpack.c.l.b16 %v982
    %v1077 = vunpack.c.h.b16 %v982
    %v1078 = vunpack.c.l.b16 %v983
    %v1079 = vunpack.c.h.b16 %v983
    %v1080 = vunpack.c.l.b16 %v984
    %v1081 = vunpack.c.h.b16 %v984
    %v1082 = vunpack.c.l.b16 %v985
    %v1083 = vunpack.c.h.b16 %v985
    %v1084 = vunpack.c.l.b16 %v986
    %v1085 = vunpack.c.h.b16 %v986
    %v1086 = vunpack.c.l.b16 %v987
    %v1087 = vunpack.c.h.b16 %v987
    %v1088 = vunpack.c.l.b16 %v988
    %v1089 = vunpack.c.h.b16 %v988
    %v1090 = vunpack.c.l.b16 %v989
    %v1091 = vunpack.c.h.b16 %v989
    %v1092 = vunpack.c.l.b16 %v990
    %v1093 = vunpack.c.h.b16 %v990
    %v1094 = vunpack.c.l.b16 %v991
    %v1095 = vunpack.c.h.b16 %v991
    %v1096 = vunpack.c.l.b16 %v992
    %v1097 = vunpack.c.h.b16 %v992
    %v1098 = vunpack.c.l.b16 %v993
    %v1099 = vunpack.c.h.b16 %v993
    %v1100 = vunpack.c.l.b16 %v994
    %v1101 = vunpack.c.h.b16 %v994
    %v1102 = vunpack.c.l.b16 %v995
    %v1103 = vunpack.c.h.b16 %v995
    %v1104 = vpack.c.b16 %v1042, %v1040
    %v1105 = vpack.c.b16 %v1043, %v1041
    %v1106 = vpack.c.b16 %v1046, %v1044
    %v1107 = vpack.c.b16 %v1047, %v1045
    %v1108 = vpack.c.b16 %v1050, %v1048
    %v1109 = vpack.c.b16 %v1051, %v1049
    %v1110 = vpack.c.b16 %v1054, %v1052
    %v1111 = vpack.c.b16 %v1055, %v1053
    %v1112 = vpack.c.b16 %v1058, %v1056
    %v1113 = vpack.c.b16 %v1059, %v1057
    %v1114 = vpack.c.b16 %v1062, %v1060
    %v1115 = vpack.c.b16 %v1063, %v1061
    %v1116 = vpack.c.b16 %v1066, %v1064
    %v1117 = vpack.c.b16 %v1067, %v1065
    %v1118 = vpack.c.b16 %v1070, %v1068
    %v1119 = vpack.c.b16 %v1071, %v1069
    %v1120 = vpack.c.b16 %v1074, %v1072
    %v1121 = vpack.c.b16 %v1075, %v1073
    %v1122 = vpack.c.b16 %v1078, %v1076
    %v1123 = vpack.c.b16 %v1079, %v1077
    %v1124 = vpack.c.b16 %v1082, %v1080
    %v1125 = vpack.c.b16 %v1083, %v1081
    %v1126 = vpack.c.b16 %v1086, %v1084
    %v1127 = vpack.c.b16 %v1087, %v1085
    %v1128 = vpack.c.b16 %v1090, %v1088
    %v1129 = vpack.c.b16 %v1091, %v1089
    %v1130 = vpack.c.b16 %v1094, %v1092
    %v1131 = vpack.c.b16 %v1095, %v1093
    %v1132 = vpack.c.b16 %v1098, %v1096
    %v1133 = vpack.c.b16 %v1099, %v1097
    %v1134 = vpack.c.b16 %v1102, %v1100
    %v1135 = vpack.c.b16 %v1103, %v1101
    %1168 = vmatprep.subr.bf16.mxu0 %v1119
    %1169 = vmatpush1.bf16.msra.mxu0 %v1118
    %1170 = vmatprep.subr.bf16.mxu0 %v1117
    %1171 = vmatpush1.bf16.msra.mxu0 %v1116
    %1172 = vmatprep.subr.bf16.mxu0 %v1115
    %1173 = vmatpush1.bf16.msra.mxu0 %v1114
    %1174 = vmatprep.subr.bf16.mxu0 %v1113
    %1175 = vmatpush1.bf16.msra.mxu0 %v1112
    %1176 = vmatprep.subr.bf16.mxu0 %v1111
    %1177 = vmatpush1.bf16.msra.mxu0 %v1110
    %1178 = vmatprep.subr.bf16.mxu0 %v1109
    %1179 = vmatpush1.bf16.msra.mxu0 %v1108
    %1180 = vmatprep.subr.bf16.mxu0 %v1107
    %1181 = vmatpush1.bf16.msra.mxu0 %v1106
    %1182 = vmatprep.subr.bf16.mxu0 %v1105
    %1183 = vmatpush1.bf16.msra.mxu0 %v1104
    %1184 = vmatprep.subr.bf16.mxu0 %v1135
    %1185 = vmatpush2.bf16.msra.mxu0 %v1134
    %1186 = vmatprep.subr.bf16.mxu0 %v1133
    %1187 = vmatpush2.bf16.msra.mxu0 %v1132
    %1188 = vmatprep.subr.bf16.mxu0 %v1131
    %1189 = vmatpush2.bf16.msra.mxu0 %v1130
    %1190 = vmatprep.subr.bf16.mxu0 %v1129
    %1191 = vmatpush2.bf16.msra.mxu0 %v1128
    %1192 = vmatprep.subr.bf16.mxu0 %v1127
    %1193 = vmatpush2.bf16.msra.mxu0 %v1126
    %1194 = vmatprep.subr.bf16.mxu0 %v1125
    %1195 = vmatpush2.bf16.msra.mxu0 %v1124
    %1196 = vmatprep.subr.bf16.mxu0 %v1123
    %1197 = vmatpush2.bf16.msra.mxu0 %v1122
    %1198 = vmatprep.subr.bf16.mxu0 %v1121
    %1199 = vmatpush2.bf16.msra.mxu0 %v1120
    %1200 = vmatprep.mubr.bf16.mxu0 %v933
    %1201 = vmatmul.mubr.bf16.gmra.mxu0 %v932
    %v1202 = vpop.f32.mrf.mxu0
    %v1203 = vadd.f32 %v1001, %v1202
    %v1204 = vpop.f32.mrf.mxu0
    %v1205 = vadd.f32 %v1005, %v1204
    %v1206 = vpop.f32.mrf.mxu0
    %v1207 = vadd.f32 %v1001, %v1206
    %v1208 = vpop.f32.mrf.mxu0
    %v1209 = vadd.f32 %v1005, %v1208
    %1210 = vmatprep.mubr.bf16.mxu0 %v935
    %1211 = vmatmul.mubr.bf16.gmra.mxu0 %v934
    %v1212 = vpop.f32.mrf.mxu0
    %v1213 = vadd.f32 %v1001, %v1212
    %v1214 = vpop.f32.mrf.mxu0
    %v1215 = vadd.f32 %v1005, %v1214
    %v1216 = vpop.f32.mrf.mxu0
    %v1217 = vadd.f32 %v1001, %v1216
    %v1218 = vpop.f32.mrf.mxu0
    %v1219 = vadd.f32 %v1005, %v1218
    %1220 = vmatprep.mubr.bf16.mxu0 %v937
    %1221 = vmatmul.mubr.bf16.gmra.mxu0 %v936
    %v1222 = vpop.f32.mrf.mxu0
    %v1223 = vadd.f32 %v1001, %v1222
    %v1224 = vpop.f32.mrf.mxu0
    %v1225 = vadd.f32 %v1005, %v1224
    %v1226 = vpop.f32.mrf.mxu0
    %v1227 = vadd.f32 %v1001, %v1226
    %v1228 = vpop.f32.mrf.mxu0
    %v1229 = vadd.f32 %v1005, %v1228
    %1230 = vmatprep.mubr.bf16.mxu0 %v939
    %1231 = vmatmul.mubr.bf16.gmra.mxu0 %v938
    %v1232 = vpop.f32.mrf.mxu0
    %v1233 = vadd.f32 %v1001, %v1232
    %v1234 = vpop.f32.mrf.mxu0
    %v1235 = vadd.f32 %v1005, %v1234
    %v1236 = vpop.f32.mrf.mxu0
    %v1237 = vadd.f32 %v1001, %v1236
    %v1238 = vpop.f32.mrf.mxu0
    %v1239 = vadd.f32 %v1005, %v1238
    %1240 = vmatprep.mubr.bf16.mxu0 %v941
    %1241 = vmatmul.mubr.bf16.gmra.mxu0 %v940
    %v1242 = vpop.f32.mrf.mxu0
    %v1243 = vadd.f32 %v1001, %v1242
    %v1244 = vpop.f32.mrf.mxu0
    %v1245 = vadd.f32 %v1005, %v1244
    %v1246 = vpop.f32.mrf.mxu0
    %v1247 = vadd.f32 %v1001, %v1246
    %v1248 = vpop.f32.mrf.mxu0
    %v1249 = vadd.f32 %v1005, %v1248
    %1250 = vmatprep.mubr.bf16.mxu0 %v943
    %1251 = vmatmul.mubr.bf16.gmra.mxu0 %v942
    %v1252 = vpop.f32.mrf.mxu0
    %v1253 = vadd.f32 %v1001, %v1252
    %v1254 = vpop.f32.mrf.mxu0
    %v1255 = vadd.f32 %v1005, %v1254
    %v1256 = vpop.f32.mrf.mxu0
    %v1257 = vadd.f32 %v1001, %v1256
    %v1258 = vpop.f32.mrf.mxu0
    %v1259 = vadd.f32 %v1005, %v1258
    %1260 = vmatprep.mubr.bf16.mxu0 %v945
    %1261 = vmatmul.mubr.bf16.gmra.mxu0 %v944
    %v1262 = vpop.f32.mrf.mxu0
    %v1263 = vadd.f32 %v1001, %v1262
    %v1264 = vpop.f32.mrf.mxu0
    %v1265 = vadd.f32 %v1005, %v1264
    %v1266 = vpop.f32.mrf.mxu0
    %v1267 = vadd.f32 %v1001, %v1266
    %v1268 = vpop.f32.mrf.mxu0
    %v1269 = vadd.f32 %v1005, %v1268
    %1270 = vmatprep.mubr.bf16.mxu0 %v947
    %1271 = vmatmul.mubr.bf16.gmra.mxu0 %v946
    %v1272 = vpop.f32.mrf.mxu0
    %v1273 = vadd.f32 %v1001, %v1272
    %v1274 = vpop.f32.mrf.mxu0
    %v1275 = vadd.f32 %v1005, %v1274
    %v1276 = vpop.f32.mrf.mxu0
    %v1277 = vadd.f32 %v1001, %v1276
    %v1278 = vpop.f32.mrf.mxu0
    %v1279 = vadd.f32 %v1005, %v1278
    %1280 = vmatprep.mubr.bf16.mxu0 %v949
    %1281 = vmatmul.mubr.bf16.gmra.mxu0 %v948
    %v1282 = vpop.f32.mrf.mxu0
    %v1283 = vadd.f32 %v1001, %v1282
    %v1284 = vpop.f32.mrf.mxu0
    %v1285 = vadd.f32 %v1005, %v1284
    %v1286 = vpop.f32.mrf.mxu0
    %v1287 = vadd.f32 %v1001, %v1286
    %v1288 = vpop.f32.mrf.mxu0
    %v1289 = vadd.f32 %v1005, %v1288
    %1290 = vmatprep.mubr.bf16.mxu0 %v951
    %1291 = vmatmul.mubr.bf16.gmra.mxu0 %v950
    %v1292 = vpop.f32.mrf.mxu0
    %v1293 = vadd.f32 %v1001, %v1292
    %v1294 = vpop.f32.mrf.mxu0
    %v1295 = vadd.f32 %v1005, %v1294
    %v1296 = vpop.f32.mrf.mxu0
    %v1297 = vadd.f32 %v1001, %v1296
    %v1298 = vpop.f32.mrf.mxu0
    %v1299 = vadd.f32 %v1005, %v1298
    %1300 = vmatprep.mubr.bf16.mxu0 %v953
    %1301 = vmatmul.mubr.bf16.gmra.mxu0 %v952
    %v1302 = vpop.f32.mrf.mxu0
    %v1303 = vadd.f32 %v1001, %v1302
    %v1304 = vpop.f32.mrf.mxu0
    %v1305 = vadd.f32 %v1005, %v1304
    %v1306 = vpop.f32.mrf.mxu0
    %v1307 = vadd.f32 %v1001, %v1306
    %v1308 = vpop.f32.mrf.mxu0
    %v1309 = vadd.f32 %v1005, %v1308
    %1310 = vmatprep.mubr.bf16.mxu0 %v955
    %1311 = vmatmul.mubr.bf16.gmra.mxu0 %v954
    %v1312 = vpop.f32.mrf.mxu0
    %v1313 = vadd.f32 %v1001, %v1312
    %v1314 = vpop.f32.mrf.mxu0
    %v1315 = vadd.f32 %v1005, %v1314
    %v1316 = vpop.f32.mrf.mxu0
    %v1317 = vadd.f32 %v1001, %v1316
    %v1318 = vpop.f32.mrf.mxu0
    %v1319 = vadd.f32 %v1005, %v1318
    %1320 = vmatprep.mubr.bf16.mxu0 %v957
    %1321 = vmatmul.mubr.bf16.gmra.mxu0 %v956
    %v1322 = vpop.f32.mrf.mxu0
    %v1323 = vadd.f32 %v1001, %v1322
    %v1324 = vpop.f32.mrf.mxu0
    %v1325 = vadd.f32 %v1005, %v1324
    %v1326 = vpop.f32.mrf.mxu0
    %v1327 = vadd.f32 %v1001, %v1326
    %v1328 = vpop.f32.mrf.mxu0
    %v1329 = vadd.f32 %v1005, %v1328
    %1330 = vmatprep.mubr.bf16.mxu0 %v959
    %1331 = vmatmul.mubr.bf16.gmra.mxu0 %v958
    %v1332 = vpop.f32.mrf.mxu0
    %v1333 = vadd.f32 %v1001, %v1332
    %v1334 = vpop.f32.mrf.mxu0
    %v1335 = vadd.f32 %v1005, %v1334
    %v1336 = vpop.f32.mrf.mxu0
    %v1337 = vadd.f32 %v1001, %v1336
    %v1338 = vpop.f32.mrf.mxu0
    %v1339 = vadd.f32 %v1005, %v1338
    %1340 = vmatprep.mubr.bf16.mxu0 %v961
    %1341 = vmatmul.mubr.bf16.gmra.mxu0 %v960
    %v1342 = vpop.f32.mrf.mxu0
    %v1343 = vadd.f32 %v1001, %v1342
    %v1344 = vpop.f32.mrf.mxu0
    %v1345 = vadd.f32 %v1005, %v1344
    %v1346 = vpop.f32.mrf.mxu0
    %v1347 = vadd.f32 %v1001, %v1346
    %v1348 = vpop.f32.mrf.mxu0
    %v1349 = vadd.f32 %v1005, %v1348
    %1350 = vmatprep.mubr.bf16.mxu0 %v963
    %1351 = vmatmul.mubr.bf16.gmra.mxu0 %v962
    %v1352 = vpop.f32.mrf.mxu0
    %v1353 = vadd.f32 %v1001, %v1352
    %v1354 = vpop.f32.mrf.mxu0
    %v1355 = vadd.f32 %v1005, %v1354
    %v1356 = vpop.f32.mrf.mxu0
    %v1357 = vadd.f32 %v1001, %v1356
    %v1358 = vpop.f32.mrf.mxu0
    %v1359 = vadd.f32 %v1005, %v1358
    %1360 = vdwg.mxu0
    %v1361 = vmax.f32 %v1203, 0.0
    %v1362 = vmax.f32 %v1205, 0.0
    %v1363 = vmax.f32 %v1207, 0.0
    %v1364 = vmax.f32 %v1209, 0.0
    %v1365 = vmax.f32 %v1213, 0.0
    %v1366 = vmax.f32 %v1215, 0.0
    %v1367 = vmax.f32 %v1217, 0.0
    %v1368 = vmax.f32 %v1219, 0.0
    %v1369 = vmax.f32 %v1223, 0.0
    %v1370 = vmax.f32 %v1225, 0.0
    %v1371 = vmax.f32 %v1227, 0.0
    %v1372 = vmax.f32 %v1229, 0.0
    %v1373 = vmax.f32 %v1233, 0.0
    %v1374 = vmax.f32 %v1235, 0.0
    %v1375 = vmax.f32 %v1237, 0.0
    %v1376 = vmax.f32 %v1239, 0.0
    %v1377 = vmax.f32 %v1243, 0.0
    %v1378 = vmax.f32 %v1245, 0.0
    %v1379 = vmax.f32 %v1247, 0.0
    %v1380 = vmax.f32 %v1249, 0.0
    %v1381 = vmax.f32 %v1253, 0.0
    %v1382 = vmax.f32 %v1255, 0.0
    %v1383 = vmax.f32 %v1257, 0.0
    %v1384 = vmax.f32 %v1259, 0.0
    %v1385 = vmax.f32 %v1263, 0.0
    %v1386 = vmax.f32 %v1265, 0.0
    %v1387 = vmax.f32 %v1267, 0.0
    %v1388 = vmax.f32 %v1269, 0.0
    %v1389 = vmax.f32 %v1273, 0.0
    %v1390 = vmax.f32 %v1275, 0.0
    %v1391 = vmax.f32 %v1277, 0.0
    %v1392 = vmax.f32 %v1279, 0.0
    %v1393 = vmax.f32 %v1283, 0.0
    %v1394 = vmax.f32 %v1285, 0.0
    %v1395 = vmax.f32 %v1287, 0.0
    %v1396 = vmax.f32 %v1289, 0.0
    %v1397 = vmax.f32 %v1293, 0.0
    %v1398 = vmax.f32 %v1295, 0.0
    %v1399 = vmax.f32 %v1297, 0.0
    %v1400 = vmax.f32 %v1299, 0.0
    %v1401 = vmax.f32 %v1303, 0.0
    %v1402 = vmax.f32 %v1305, 0.0
    %v1403 = vmax.f32 %v1307, 0.0
    %v1404 = vmax.f32 %v1309, 0.0
    %v1405 = vmax.f32 %v1313, 0.0
    %v1406 = vmax.f32 %v1315, 0.0
    %v1407 = vmax.f32 %v1317, 0.0
    %v1408 = vmax.f32 %v1319, 0.0
    %v1409 = vmax.f32 %v1323, 0.0
    %v1410 = vmax.f32 %v1325, 0.0
    %v1411 = vmax.f32 %v1327, 0.0
    %v1412 = vmax.f32 %v1329, 0.0
    %v1413 = vmax.f32 %v1333, 0.0
    %v1414 = vmax.f32 %v1335, 0.0
    %v1415 = vmax.f32 %v1337, 0.0
    %v1416 = vmax.f32 %v1339, 0.0
    %v1417 = vmax.f32 %v1343, 0.0
    %v1418 = vmax.f32 %v1345, 0.0
    %v1419 = vmax.f32 %v1347, 0.0
    %v1420 = vmax.f32 %v1349, 0.0
    %v1421 = vmax.f32 %v1353, 0.0
    %v1422 = vmax.f32 %v1355, 0.0
    %v1423 = vmax.f32 %v1357, 0.0
    %v1424 = vmax.f32 %v1359, 0.0
    %v1425 = vld [vmem:[%s7] sm:$0x3]
    %v1426 = vpack.c.bf16 %v1363, %v1361
    %v1427 = vpack.c.bf16 %v1364, %v1362
    %v1428 = vpack.c.bf16 %v1367, %v1365
    %v1429 = vpack.c.bf16 %v1368, %v1366
    %v1430 = vpack.c.bf16 %v1371, %v1369
    %v1431 = vpack.c.bf16 %v1372, %v1370
    %v1432 = vpack.c.bf16 %v1375, %v1373
    %v1433 = vpack.c.bf16 %v1376, %v1374
    %v1434 = vpack.c.bf16 %v1379, %v1377
    %v1435 = vpack.c.bf16 %v1380, %v1378
    %v1436 = vpack.c.bf16 %v1383, %v1381
    %v1437 = vpack.c.bf16 %v1384, %v1382
    %v1438 = vpack.c.bf16 %v1387, %v1385
    %v1439 = vpack.c.bf16 %v1388, %v1386
    %v1440 = vpack.c.bf16 %v1391, %v1389
    %v1441 = vpack.c.bf16 %v1392, %v1390
    %v1442 = vpack.c.bf16 %v1395, %v1393
    %v1443 = vpack.c.bf16 %v1396, %v1394
    %v1444 = vpack.c.bf16 %v1399, %v1397
    %v1445 = vpack.c.bf16 %v1400, %v1398
    %v1446 = vpack.c.bf16 %v1403, %v1401
    %v1447 = vpack.c.bf16 %v1404, %v1402
    %v1448 = vpack.c.bf16 %v1407, %v1405
    %v1449 = vpack.c.bf16 %v1408, %v1406
    %v1450 = vpack.c.bf16 %v1411, %v1409
    %v1451 = vpack.c.bf16 %v1412, %v1410
    %v1452 = vpack.c.bf16 %v1415, %v1413
    %v1453 = vpack.c.bf16 %v1416, %v1414
    %v1454 = vpack.c.bf16 %v1419, %v1417
    %v1455 = vpack.c.bf16 %v1420, %v1418
    %v1456 = vpack.c.bf16 %v1423, %v1421
    %v1457 = vpack.c.bf16 %v1424, %v1422
    %s1458 = sld [smem:[#allocation2]]
    %v1459 = vstv %s1458
    %v1462 = vunpack.c.l.s4 1966171168
    %v1463 = vunpack.c.0.s8 %v1462
    %v1464 = vlaneseq
    %v1465 = vshrl.u32 %v1464, 7
    %v1466 = vsub.s32 %v1463, %v1465
    %v1467 = vrot.slane %v1425, %v1466
    %v1468 = vcombine.high %v1467, %v1467
    %v1470 = vunpack.c.l.s4 1966171168
    %v1471 = vunpack.c.0.s8 %v1470
    %v1472 = vlaneseq
    %v1473 = vshrl.u32 %v1472, 7
    %v1474 = vsub.s32 %v1471, %v1473
    %v1475 = vrot.slane %v1467, %v1474
    %v1477 = vunpack.c.l.s4 1966171168
    %v1478 = vunpack.c.0.s8 %v1477
    %v1479 = vlaneseq
    %v1480 = vshrl.u32 %v1479, 7
    %v1481 = vsub.s32 %v1478, %v1480
    %v1482 = vrot.slane %v1468, %v1481
    %1485 = vmatprep.subr.bf16.mxu0 %v1441
    %1486 = vmatpush1.bf16.xpose.msra.mxu0 %v1440
    %1487 = vmatprep.subr.bf16.mxu0 %v1439
    %1488 = vmatpush1.bf16.xpose.msra.mxu0 %v1438
    %1489 = vmatprep.subr.bf16.mxu0 %v1437
    %1490 = vmatpush1.bf16.xpose.msra.mxu0 %v1436
    %1491 = vmatprep.subr.bf16.mxu0 %v1435
    %1492 = vmatpush1.bf16.xpose.msra.mxu0 %v1434
    %1493 = vmatprep.subr.bf16.mxu0 %v1433
    %1494 = vmatpush1.bf16.xpose.msra.mxu0 %v1432
    %1495 = vmatprep.subr.bf16.mxu0 %v1431
    %1496 = vmatpush1.bf16.xpose.msra.mxu0 %v1430
    %1497 = vmatprep.subr.bf16.mxu0 %v1429
    %1498 = vmatpush1.bf16.xpose.msra.mxu0 %v1428
    %1499 = vmatprep.subr.bf16.mxu0 %v1427
    %1500 = vmatpush1.bf16.xpose.msra.mxu0 %v1426
    %1501 = vmatprep.subr.bf16.mxu0 %v1457
    %1502 = vmatpush2.bf16.xpose.msra.mxu0 %v1456
    %1503 = vmatprep.subr.bf16.mxu0 %v1455
    %1504 = vmatpush2.bf16.xpose.msra.mxu0 %v1454
    %1505 = vmatprep.subr.bf16.mxu0 %v1453
    %1506 = vmatpush2.bf16.xpose.msra.mxu0 %v1452
    %1507 = vmatprep.subr.bf16.mxu0 %v1451
    %1508 = vmatpush2.bf16.xpose.msra.mxu0 %v1450
    %1509 = vmatprep.subr.bf16.mxu0 %v1449
    %1510 = vmatpush2.bf16.xpose.msra.mxu0 %v1448
    %1511 = vmatprep.subr.bf16.mxu0 %v1447
    %1512 = vmatpush2.bf16.xpose.msra.mxu0 %v1446
    %1513 = vmatprep.subr.bf16.mxu0 %v1445
    %1514 = vmatpush2.bf16.xpose.msra.mxu0 %v1444
    %1515 = vmatprep.subr.bf16.mxu0 %v1443
    %1516 = vmatpush2.bf16.xpose.msra.mxu0 %v1442
    %1517 = vmatprep.mubr.bf16.mxu0 %v1482
    %1518 = vmatmul.mubr.bf16.gmra.mxu0 %v1475
    %v1519 = vpop.f32.mrf.mxu0
    %v1520 = vadd.f32 %v1459, %v1519
    %v1521 = vpop.f32.mrf.mxu0
    %v1522 = vadd.f32 %v1459, %v1521
    %v1523 = vpop.f32.mrf.mxu0
    %v1524 = vpop.f32.mrf.mxu0
    %1525 = vdwg.mxu0
    %v1526 = vsub.f32 0.0, %v1520
    %v1527 = vsub.f32 0.0, %v1522
    %v1528 = vmul.f32 %v1526, 1.442695
    %v1529 = vpow.pop %v1528
    %v1530 = vmul.f32 %v1527, 1.442695
    %v1531 = vpow.pop %v1530
    %v1532 = vadd.f32 %v1529, 1.0
    %v1533 = vadd.f32 %v1531, 1.0
    %v1534 = vrcp.pop %v1532
    %v1535 = vmul.f32 1.0, %v1534
    %v1536 = vrcp.pop %v1533
    %v1537 = vmul.f32 1.0, %v1536
    %v1540 = vcombine.low %v1535, %v1537
    %v1542 = vunpack.c.l.s4 1966171168
    %v1543 = vunpack.c.0.s8 %v1542
    %v1544 = vlaneseq
    %v1545 = vshrl.u32 %v1544, 7
    %v1546 = vsub.s32 %v1543, %v1545
    %v1547 = vrot.slane %v1540, %v1546
    %v1549 = vunpack.c.l.s4 1966171168
    %v1550 = vunpack.c.0.s8 %v1549
    %v1551 = vlaneseq
    %v1552 = vshrl.u32 %v1551, 7
    %v1553 = vsub.s32 %v1550, %v1552
    %v1554 = vrot.slane %v1547, %v1553
    %v1556 = vlaneseq
    %vm1557 = vcmp.ge.s32.totalorder %v1556, 0
    %vm1558 = vcmp.lt.s32.totalorder %v1556, 256
    %vm1559 = vmand %vm1557, %vm1558
    %1560 = vst.msk [vmem:[#allocation6] sm:$0x3] %vm1559, %v1554
    // Predicated region
    $region42: #{tpu_custom_call.1} parent=1 // pred_check
      _
    $region43: #{tpu_custom_call.1} parent=1 // pred_check_branch
      %1562 = sbr.rel (0) target = $region45
    $region44: #{tpu_custom_call.1} parent=1 // pred_region
      %s1564 = ssub.s32 32, 32
      %1565 = vsyncadd [#allocation5], %s1564
      %s1567 = sshll.u32 [#allocation6], 4
      %s1568 = int_to_ptr.vmem [resolvable:$true] %s1567
      %1570 = dma.vmem_to_hbm [thread:$0]  %s1568, 32, %s9, [#allocation5]
    $region45: #{tpu_custom_call.1} parent=1 // pred_fallthru
      _
    // Predicated region
    $region46: #{tpu_custom_call.1} parent=1 // pred_check
      _
    $region47: #{tpu_custom_call.1} parent=1 // pred_check_branch
      %1572 = sbr.rel (0) target = $region49
    $region48: #{tpu_custom_call.1} parent=1 // pred_region
      %1573 = dma.done [#allocation5], 32
    $region49: #{tpu_custom_call.1} parent=1 // pred_fallthru
      _
    %1574 = vsyncpa [#allocation4], 1
    %1575 = vsyncpa [#allocation5], 1

</llo_original>
